<compile_context>
chip_gen: v5e
topology: v5e:2x2
jax: 0.10.0
libtpu: 0.0.40
codegen_flags: <defaults>
</compile_context>

<pallas_src>
import math
import numpy as np
import jax
import jax.numpy as jnp
from jax.experimental import pallas as pl
from jax.experimental.pallas import tpu as pltpu

# ---------------- config (small synthetic shapes consistent with the module) ---------
N, I, C_IN, T, V, M = 2, 2, 3, 16, 8, 1
BLOCK_ARGS = [[8, 1, 1], [16, 1, 1]]       # [channel, stride, depth]
FUSION_STAGE = 1
STEM_CHANNEL = 8
TEMPORAL_WINDOW = 5
MAX_GRAPH_DIST = 1
K_SPATIAL = MAX_GRAPH_DIST + 1
NUM_CLASS = 10
BN_EPS = 1e-5
BN_SCALE = 1.0 / math.sqrt(1.0 + BN_EPS)   # inference BN (mean=0, var=1, g=1, b=0)

B = N * M
L = B * T * V                              # 256: batch folded onto the lane axis
PAD = (TEMPORAL_WINDOW - 1) // 2
CH = I * STEM_CHANNEL                      # fused channel width of every activation
ROW_CL = TEMPORAL_WINDOW                   # lane-constant rows: 0..tw-1 temporal masks,
ROW_CR = TEMPORAL_WINDOW + 1               # tw = hop-1 left coeff, tw+1 = right coeff
LANE_ROWS = max(8, TEMPORAL_WINDOW + 2)


# ---------------- BlockSpec helpers (whole arrays, no grid) ---------------------------
def _zero_map(nd):
    return lambda: (0,) * nd


def full_spec(shape):
    return pl.BlockSpec(tuple(shape), _zero_map(len(shape)))


# ---------------- single fused kernel for the entire network --------------------------
def make_kernel(plan):
    tw = TEMPORAL_WINDOW
    att_gain = 1.0 + BN_SCALE              # relu(bn(y*att(y)) + y) with att==1, y>=0

    def kernel(x_ref, w_ref, lane_ref, pool_ref, fcw_ref, feat_ref, logit_ref):
        lane = lane_ref[...]                        # (LANE_ROWS, L) f32 constants
        c_left = lane[ROW_CL:ROW_CL + 1, :]         # hop-1 adjacency coeffs (1, L)
        c_right = lane[ROW_CR:ROW_CR + 1, :]

        def scn(x, d):
            # Spatial_Graph_Layer: relu( bn(sum_k (W_k x) A_k) + residual ), BN folded.
            # hop-0: A_0 == I (skip); hop-1 (chain): two 1-lane rolls * per-joint coeffs.
            xb = x.astype(jnp.bfloat16)
            w = w_ref[d['w']:d['w'] + K_SPATIAL * CH, :]                 # bf16 slab slice
            z = jnp.dot(w, xb, preferred_element_type=jnp.float32)       # (K*CH, L)
            z1 = z[CH:2 * CH, :]
            acc = (z[0:CH, :]
                   + pltpu.roll(z1, shift=1, axis=1) * c_left
                   + pltpu.roll(z1, shift=L - 1, axis=1) * c_right)
            if d['rw'] is not None:                  # conv1x1 (+BN, folded) residual
                rw = w_ref[d['rw']:d['rw'] + CH, :]
                res = jnp.dot(rw, xb, preferred_element_type=jnp.float32)
            else:                                    # identity residual
                res = x
            return jnp.maximum(acc + res, 0.0)

        def tcn(x, d):
            # Temporal_Basic_Layer (stride=1): relu( bn(temporal_conv(x)) + x ), BN folded.
            xb = x.astype(jnp.bfloat16)
            w = w_ref[d['w']:d['w'] + tw * CH, :]
            z = jnp.dot(w, xb, preferred_element_type=jnp.float32)       # (tw*CH, L)
            acc = z[PAD * CH:(PAD + 1) * CH, :]                          # centre tap
            for dw in range(tw):                                         # static unroll
                if dw == PAD:
                    continue
                shift = ((PAD - dw) * V) % L
                acc = acc + (pltpu.roll(z[dw * CH:(dw + 1) * CH, :], shift=shift, axis=1)
                             * lane[dw:dw + 1, :])
            y = jnp.maximum(acc + x, 0.0)
            if d['att']:
                # Attention_Layer fused: relu(bn(y*1) + y) == (1 + BN_SCALE) * y (y >= 0)
                y = y * att_gain
            return y

        x = x_ref[...]
        for d in plan['layers']:
            x = scn(x, d) if d['kind'] == 'scn' else tcn(x, d)
        feat_ref[...] = x

        # classifier: GAP over (M,T,V) (Dropout identity in eval) + Conv3d 1x1 (bias 0)
        pooled = jnp.dot(x, pool_ref[...], preferred_element_type=jnp.float32)  # (CH, N)
        logit_ref[...] = jnp.dot(fcw_ref[...], pooled,
                                 preferred_element_type=jnp.float32)

    return kernel


# ---------------- forward wrapper (layout plumbing only) ------------------------------
def make_forward(plan):
    kernel = make_kernel(plan)

    def forward(x, w_slab, lane_c, pool_p, fc_w):
        n, i_num, c, t, v, m = x.shape
        # (N,I,C,T,V,M) -> (I*C, N*M*T*V): channels on sublanes, batch lane-dense;
        # branch inputs stacked on the channel axis and zero-padded to CH rows.
        x2d = jnp.transpose(x, (1, 2, 0, 5, 3, 4)).reshape(i_num * c, L)
        x_pad = jnp.zeros((CH, L), jnp.float32).at[:i_num * c, :].set(x2d)
        inputs = (x_pad, w_slab, lane_c, pool_p, fc_w)
        feat2d, logit_t = pl.pallas_call(
            kernel,
            out_shape=(jax.ShapeDtypeStruct((CH, L), jnp.float32),
                       jax.ShapeDtypeStruct((NUM_CLASS, N), jnp.float32)),
            in_specs=[full_spec(a.shape) for a in inputs],
            out_specs=(full_spec((CH, L)), full_spec((NUM_CLASS, N))),
        )(*inputs)
        feature = jnp.transpose(feat2d.reshape(CH, n, m, t, v), (1, 0, 3, 4, 2))
        logits = jnp.transpose(logit_t, (1, 0))
        return logits, feature

    return forward


# ---------------- constants: lane masks / adjacency coeffs / pooling matrix -----------
def build_constants():
    # chain skeleton, per-hop row-normalized adjacency (same construction as v1)
    adj = np.zeros((V, V), np.float32)
    for i in range(V - 1):
        adj[i, i + 1] = 1.0
        adj[i + 1, i] = 1.0
    hops = [np.eye(V, dtype=np.float32)]
    reach = np.eye(V, dtype=np.float32)
    for _ in range(1, K_SPATIAL):
        reach = (reach @ adj > 0).astype(np.float32)
        hops.append(reach)
    A = []
    for h in hops:
        d = h.sum(axis=1, keepdims=True)
        d[d == 0] = 1.0
        A.append(h / d)
    A = np.stack(A)                                                     # (K, V, V)

    assert K_SPATIAL == 2, "roll-based adjacency assumes hops {identity, 1-ring}"
    assert np.allclose(A[0], np.eye(V)), "hop-0 must be the identity"
    off = np.abs(np.subtract.outer(np.arange(V), np.arange(V)))
    assert np.all(A[1][off != 1] == 0.0), "hop-1 must be tridiagonal (chain skeleton)"

    lane = np.zeros((LANE_ROWS, L), np.float32)
    t_idx = (np.arange(L) % (T * V)) // V            # time index of every lane
    j_idx = np.arange(L) % V                         # joint index of every lane
    # temporal-shift validity masks (zero padding at the ends of each sample's T axis):
    # acc[:, (b,t,v)] += z_dw[:, (b, t+dw-PAD, v)] iff 0 <= t+dw-PAD < T
    for dw in range(TEMPORAL_WINDOW):
        o = dw - PAD
        lane[dw] = ((t_idx + o >= 0) & (t_idx + o < T)).astype(np.float32)
    # hop-1 adjacency as per-lane coefficients:
    #   (z @ (I (x) A1))[:, l] = z[:, l-1] * cL[l] + z[:, l+1] * cR[l]
    cl = np.where(j_idx >= 1, A[1][np.clip(j_idx - 1, 0, V - 1), j_idx], 0.0)
    cr = np.where(j_idx <= V - 2, A[1][np.clip(j_idx + 1, 0, V - 1), j_idx], 0.0)
    lane[ROW_CL] = cl
    lane[ROW_CR] = cr

    # global average pool over (M, T, V) per sample: pooled = x @ P
    P = np.zeros((L, N), np.float32)
    for n in range(N):
        P[n * M * T * V:(n + 1) * M * T * V, n] = 1.0 / (M * T * V)

    return jnp.asarray(lane), jnp.asarray(P)


# ---------------- parameter init: one bf16 slab + static layer plan -------------------
def init_params(key):
    gain = math.sqrt(2.0 / (1.0 + 0.01 ** 2))   # kaiming_normal, leaky_relu(0.01), fan_out
    kit = iter(jax.random.split(key, 64))

    def kaiming(shape, fan_out):
        return np.asarray((gain / math.sqrt(fan_out))
                          * jax.random.normal(next(kit), shape, dtype=jnp.float32))

    def scn_w(cin, cout, scale):
        # Conv2d(cin, K*cout, 1) of the spatial graph conv, hop-major rows, BN folded.
        return kaiming((K_SPATIAL * cout, cin), K_SPATIAL * cout) * scale

    def res_w(cin, cout, scale):
        # Conv2d(cin, cout, 1) + BN residual (used when cin != cout), BN folded.
        return kaiming((cout, cin), cout) * scale

    def tcn_w(cin, cout):
        # Conv2d(cout, cin, (tw,1)) temporal conv, window-offset-major rows, BN folded.
        w4 = kaiming((cout, cin, TEMPORAL_WINDOW), cout * TEMPORAL_WINDOW)
        return np.transpose(w4, (2, 0, 1)).reshape(TEMPORAL_WINDOW * cout, cin) * BN_SCALE

    rows, layers = [], []

    def add(w):
        off = sum(r.shape[0] for r in rows)
        rows.append(w)
        return off

    def fuse(ws, group, cins):
        # Stack per-branch weights block-diagonally into (group*CH, CH), group-major rows.
        couts = [w.shape[0] // group for w in ws]
        assert sum(couts) == CH, "fused layer width must stay constant at CH"
        out = np.zeros((group * CH, CH), np.float32)
        for g in range(group):
            ro, co = 0, 0
            for w, cb, ci in zip(ws, couts, cins):
                out[g * CH + ro:g * CH + ro + cb, co:co + ci] = w[g * cb:(g + 1) * cb, :]
                ro += cb
                co += ci
        return out

    def add_scn(cins, couts, extra_scale=1.0):
        ws = [scn_w(ci, co, BN_SCALE * extra_scale) for ci, co in zip(cins, couts)]
        d = dict(kind='scn', w=add(fuse(ws, K_SPATIAL, cins)), rw=None)
        if any(ci != co for ci, co in zip(cins, couts)):        # conv1x1+BN residual
            rs = [res_w(ci, co, BN_SCALE * extra_scale) for ci, co in zip(cins, couts)]
            d['rw'] = add(fuse(rs, 1, cins))
        layers.append(d)

    def add_tcn(cins, couts, att):
        # TODO(synk): temporal layer_type / stride kwargs unspecified;
        # Temporal_Basic_Layer with stride=1 (identity residual) is assumed.
        assert cins == couts, "identity temporal residual requires cin == cout"
        ws = [tcn_w(ci, co) for ci, co in zip(cins, couts)]
        layers.append(dict(kind='tcn', w=add(fuse(ws, TEMPORAL_WINDOW, cins)), att=att))

    assert I * C_IN <= CH and I * STEM_CHANNEL == CH, \
        "single-slab layout assumes a constant fused channel width"

    # --- input branches (fused block-diagonally; channel concat falls out for free) ---
    # init_bn is folded into the stem weights as an extra BN_SCALE on the input.
    add_scn([C_IN] * I, [STEM_CHANNEL] * I, extra_scale=BN_SCALE)     # stem_scn
    add_tcn([STEM_CHANNEL] * I, [STEM_CHANNEL] * I, att=False)        # stem_tcn
    last = STEM_CHANNEL
    for (channel, _stride, depth) in BLOCK_ARGS[:FUSION_STAGE]:
        if depth == 1:
            add_scn([last] * I, [channel] * I)
        add_tcn([channel if depth == 1 else last] * I, [channel] * I, att=True)
        last = channel
    assert I * last == CH

    # --- main stream (single dense chain over the CH concatenated channels) ----------
    last = CH
    for (channel, _stride, depth) in BLOCK_ARGS[FUSION_STAGE:]:
        assert channel == CH, "single-slab layout assumes constant fused width"
        if depth == 1:
            add_scn([last], [channel])
        add_tcn([channel if depth == 1 else last], [channel], att=True)
        last = channel

    w_slab = jnp.asarray(np.concatenate(rows, axis=0)).astype(jnp.bfloat16)

    # classifier Conv3d(CH, NUM_CLASS, 1): normal(std=0.001); its bias init is 0 -> dropped.
    fc_w = 0.001 * jax.random.normal(next(kit), (NUM_CLASS, CH), dtype=jnp.float32)

    plan = dict(layers=layers)
    return plan, w_slab, fc_w


# ---------------- main -----------------------------------------------------------------
if __name__ == "__main__":
    key = jax.random.PRNGKey(0)
    kx, kp = jax.random.split(key)
    x = jax.random.normal(kx, (N, I, C_IN, T, V, M), dtype=jnp.float32)

    plan, w_slab, fc_w = init_params(kp)
    lane_c, pool_p = build_constants()
    forward = make_forward(plan)

    fwd = jax.jit(forward)
    out, feature = fwd(x, w_slab, lane_c, pool_p, fc_w)
    jax.block_until_ready(out)
    jax.block_until_ready(feature)

    assert out.shape == (N, NUM_CLASS), out.shape
    assert feature.shape == (N, BLOCK_ARGS[-1][0], T, V, M), feature.shape
    assert bool(jnp.all(jnp.isfinite(out))) and bool(jnp.all(jnp.isfinite(feature)))
    print("KERNEL_OK")
</pallas_src>

<mosaic_0001>
module attributes {stable_mosaic.version = 11 : i64} {
  func.func @kernel(%arg0: memref<16x256xf32, #tpu.memory_space<vmem>>, %arg1: memref<352x16xbf16, #tpu.memory_space<vmem>>, %arg2: memref<8x256xf32, #tpu.memory_space<vmem>>, %arg3: memref<256x2xf32, #tpu.memory_space<vmem>>, %arg4: memref<10x16xf32, #tpu.memory_space<vmem>>, %arg5: memref<16x256xf32, #tpu.memory_space<vmem>>, %arg6: memref<10x2xf32, #tpu.memory_space<vmem>>) attributes {dimension_semantics = [], scalar_prefetch = 0 : i64, scratch_operands = 0 : i64, tpu.core_type = #tpu.core_type<tc>} {
    %c0 = arith.constant 0 : index
    %c0_0 = arith.constant 0 : index
    %0 = vector.load %arg2[%c0, %c0_0] : memref<8x256xf32, #tpu.memory_space<vmem>>, vector<8x256xf32>
    %1 = vector.extract_strided_slice %0 {offsets = [5, 0], sizes = [1, 256], strides = [1, 1]} : vector<8x256xf32> to vector<1x256xf32>
    %2 = vector.extract_strided_slice %0 {offsets = [6, 0], sizes = [1, 256], strides = [1, 1]} : vector<8x256xf32> to vector<1x256xf32>
    %c0_1 = arith.constant 0 : index
    %c0_2 = arith.constant 0 : index
    %3 = vector.load %arg0[%c0_1, %c0_2] : memref<16x256xf32, #tpu.memory_space<vmem>>, vector<16x256xf32>
    %4 = arith.truncf %3 : vector<16x256xf32> to vector<16x256xbf16>
    %c0_3 = arith.constant 0 : index
    %c0_4 = arith.constant 0 : index
    %5 = vector.load %arg1[%c0_3, %c0_4] : memref<352x16xbf16, #tpu.memory_space<vmem>>, vector<32x16xbf16>
    %cst = arith.constant dense<0.000000e+00> : vector<32x256xf32>
    %6 = tpu.matmul %5, %4, %cst {dimension_numbers = #tpu.dot_dimension_numbers<[1], [0], [0], [1], [0, 0, 1, 1], [], []>} : vector<32x16xbf16>, vector<16x256xbf16>, vector<32x256xf32> -> vector<32x256xf32>
    %7 = vector.extract_strided_slice %6 {offsets = [16, 0], sizes = [16, 256], strides = [1, 1]} : vector<32x256xf32> to vector<16x256xf32>
    %8 = vector.extract_strided_slice %6 {offsets = [0, 0], sizes = [16, 256], strides = [1, 1]} : vector<32x256xf32> to vector<16x256xf32>
    %c1_i32 = arith.constant 1 : i32
    %9 = tpu.dynamic_rotate %7 by %c1_i32 dim 1 : vector<16x256xf32>, i32 -> vector<16x256xf32>
    %10 = vector.broadcast %1 : vector<1x256xf32> to vector<16x256xf32>
    %11 = arith.mulf %9, %10 : vector<16x256xf32>
    %12 = arith.addf %8, %11 : vector<16x256xf32>
    %c255_i32 = arith.constant 255 : i32
    %13 = tpu.dynamic_rotate %7 by %c255_i32 dim 1 : vector<16x256xf32>, i32 -> vector<16x256xf32>
    %14 = vector.broadcast %2 : vector<1x256xf32> to vector<16x256xf32>
    %15 = arith.mulf %13, %14 : vector<16x256xf32>
    %16 = arith.addf %12, %15 : vector<16x256xf32>
    %c32 = arith.constant 32 : index
    %c0_5 = arith.constant 0 : index
    %17 = vector.load %arg1[%c32, %c0_5] : memref<352x16xbf16, #tpu.memory_space<vmem>>, vector<16x16xbf16>
    %cst_6 = arith.constant dense<0.000000e+00> : vector<16x256xf32>
    %18 = tpu.matmul %17, %4, %cst_6 {dimension_numbers = #tpu.dot_dimension_numbers<[1], [0], [0], [1], [0, 0, 1, 1], [], []>} : vector<16x16xbf16>, vector<16x256xbf16>, vector<16x256xf32> -> vector<16x256xf32>
    %19 = arith.addf %16, %18 : vector<16x256xf32>
    %cst_7 = arith.constant 0.000000e+00 : f32
    %20 = vector.broadcast %cst_7 : f32 to vector<16x256xf32>
    %21 = arith.maximumf %19, %20 : vector<16x256xf32>
    %22 = arith.truncf %21 : vector<16x256xf32> to vector<16x256xbf16>
    %c48 = arith.constant 48 : index
    %c0_8 = arith.constant 0 : index
    %23 = vector.load %arg1[%c48, %c0_8] : memref<352x16xbf16, #tpu.memory_space<vmem>>, vector<80x16xbf16>
    %cst_9 = arith.constant dense<0.000000e+00> : vector<80x256xf32>
    %24 = tpu.matmul %23, %22, %cst_9 {dimension_numbers = #tpu.dot_dimension_numbers<[1], [0], [0], [1], [0, 0, 1, 1], [], []>} : vector<80x16xbf16>, vector<16x256xbf16>, vector<80x256xf32> -> vector<80x256xf32>
    %25 = vector.extract_strided_slice %24 {offsets = [32, 0], sizes = [16, 256], strides = [1, 1]} : vector<80x256xf32> to vector<16x256xf32>
    %26 = vector.extract_strided_slice %24 {offsets = [0, 0], sizes = [16, 256], strides = [1, 1]} : vector<80x256xf32> to vector<16x256xf32>
    %c16_i32 = arith.constant 16 : i32
    %27 = tpu.dynamic_rotate %26 by %c16_i32 dim 1 : vector<16x256xf32>, i32 -> vector<16x256xf32>
    %28 = vector.extract_strided_slice %0 {offsets = [0, 0], sizes = [1, 256], strides = [1, 1]} : vector<8x256xf32> to vector<1x256xf32>
    %29 = vector.broadcast %28 : vector<1x256xf32> to vector<16x256xf32>
    %30 = arith.mulf %27, %29 : vector<16x256xf32>
    %31 = arith.addf %25, %30 : vector<16x256xf32>
    %32 = vector.extract_strided_slice %24 {offsets = [16, 0], sizes = [16, 256], strides = [1, 1]} : vector<80x256xf32> to vector<16x256xf32>
    %c8_i32 = arith.constant 8 : i32
    %33 = tpu.dynamic_rotate %32 by %c8_i32 dim 1 : vector<16x256xf32>, i32 -> vector<16x256xf32>
    %34 = vector.extract_strided_slice %0 {offsets = [1, 0], sizes = [1, 256], strides = [1, 1]} : vector<8x256xf32> to vector<1x256xf32>
    %35 = vector.broadcast %34 : vector<1x256xf32> to vector<16x256xf32>
    %36 = arith.mulf %33, %35 : vector<16x256xf32>
    %37 = arith.addf %31, %36 : vector<16x256xf32>
    %38 = vector.extract_strided_slice %24 {offsets = [48, 0], sizes = [16, 256], strides = [1, 1]} : vector<80x256xf32> to vector<16x256xf32>
    %c248_i32 = arith.constant 248 : i32
    %39 = tpu.dynamic_rotate %38 by %c248_i32 dim 1 : vector<16x256xf32>, i32 -> vector<16x256xf32>
    %40 = vector.extract_strided_slice %0 {offsets = [3, 0], sizes = [1, 256], strides = [1, 1]} : vector<8x256xf32> to vector<1x256xf32>
    %41 = vector.broadcast %40 : vector<1x256xf32> to vector<16x256xf32>
    %42 = arith.mulf %39, %41 : vector<16x256xf32>
    %43 = arith.addf %37, %42 : vector<16x256xf32>
    %44 = vector.extract_strided_slice %24 {offsets = [64, 0], sizes = [16, 256], strides = [1, 1]} : vector<80x256xf32> to vector<16x256xf32>
    %c240_i32 = arith.constant 240 : i32
    %45 = tpu.dynamic_rotate %44 by %c240_i32 dim 1 : vector<16x256xf32>, i32 -> vector<16x256xf32>
    %46 = vector.extract_strided_slice %0 {offsets = [4, 0], sizes = [1, 256], strides = [1, 1]} : vector<8x256xf32> to vector<1x256xf32>
    %47 = vector.broadcast %46 : vector<1x256xf32> to vector<16x256xf32>
    %48 = arith.mulf %45, %47 : vector<16x256xf32>
    %49 = arith.addf %43, %48 : vector<16x256xf32>
    %50 = arith.addf %49, %21 : vector<16x256xf32>
    %cst_10 = arith.constant 0.000000e+00 : f32
    %51 = vector.broadcast %cst_10 : f32 to vector<16x256xf32>
    %52 = arith.maximumf %50, %51 : vector<16x256xf32>
    %53 = arith.truncf %52 : vector<16x256xf32> to vector<16x256xbf16>
    %c128 = arith.constant 128 : index
    %c0_11 = arith.constant 0 : index
    %54 = vector.load %arg1[%c128, %c0_11] : memref<352x16xbf16, #tpu.memory_space<vmem>>, vector<32x16xbf16>
    %cst_12 = arith.constant dense<0.000000e+00> : vector<32x256xf32>
    %55 = tpu.matmul %54, %53, %cst_12 {dimension_numbers = #tpu.dot_dimension_numbers<[1], [0], [0], [1], [0, 0, 1, 1], [], []>} : vector<32x16xbf16>, vector<16x256xbf16>, vector<32x256xf32> -> vector<32x256xf32>
    %56 = vector.extract_strided_slice %55 {offsets = [16, 0], sizes = [16, 256], strides = [1, 1]} : vector<32x256xf32> to vector<16x256xf32>
    %57 = vector.extract_strided_slice %55 {offsets = [0, 0], sizes = [16, 256], strides = [1, 1]} : vector<32x256xf32> to vector<16x256xf32>
    %c1_i32_13 = arith.constant 1 : i32
    %58 = tpu.dynamic_rotate %56 by %c1_i32_13 dim 1 : vector<16x256xf32>, i32 -> vector<16x256xf32>
    %59 = vector.broadcast %1 : vector<1x256xf32> to vector<16x256xf32>
    %60 = arith.mulf %58, %59 : vector<16x256xf32>
    %61 = arith.addf %57, %60 : vector<16x256xf32>
    %c255_i32_14 = arith.constant 255 : i32
    %62 = tpu.dynamic_rotate %56 by %c255_i32_14 dim 1 : vector<16x256xf32>, i32 -> vector<16x256xf32>
    %63 = vector.broadcast %2 : vector<1x256xf32> to vector<16x256xf32>
    %64 = arith.mulf %62, %63 : vector<16x256xf32>
    %65 = arith.addf %61, %64 : vector<16x256xf32>
    %66 = arith.addf %65, %52 : vector<16x256xf32>
    %cst_15 = arith.constant 0.000000e+00 : f32
    %67 = vector.broadcast %cst_15 : f32 to vector<16x256xf32>
    %68 = arith.maximumf %66, %67 : vector<16x256xf32>
    %69 = arith.truncf %68 : vector<16x256xf32> to vector<16x256xbf16>
    %c160 = arith.constant 160 : index
    %c0_16 = arith.constant 0 : index
    %70 = vector.load %arg1[%c160, %c0_16] : memref<352x16xbf16, #tpu.memory_space<vmem>>, vector<80x16xbf16>
    %cst_17 = arith.constant dense<0.000000e+00> : vector<80x256xf32>
    %71 = tpu.matmul %70, %69, %cst_17 {dimension_numbers = #tpu.dot_dimension_numbers<[1], [0], [0], [1], [0, 0, 1, 1], [], []>} : vector<80x16xbf16>, vector<16x256xbf16>, vector<80x256xf32> -> vector<80x256xf32>
    %72 = vector.extract_strided_slice %71 {offsets = [32, 0], sizes = [16, 256], strides = [1, 1]} : vector<80x256xf32> to vector<16x256xf32>
    %73 = vector.extract_strided_slice %71 {offsets = [0, 0], sizes = [16, 256], strides = [1, 1]} : vector<80x256xf32> to vector<16x256xf32>
    %c16_i32_18 = arith.constant 16 : i32
    %74 = tpu.dynamic_rotate %73 by %c16_i32_18 dim 1 : vector<16x256xf32>, i32 -> vector<16x256xf32>
    %75 = vector.extract_strided_slice %0 {offsets = [0, 0], sizes = [1, 256], strides = [1, 1]} : vector<8x256xf32> to vector<1x256xf32>
    %76 = vector.broadcast %75 : vector<1x256xf32> to vector<16x256xf32>
    %77 = arith.mulf %74, %76 : vector<16x256xf32>
    %78 = arith.addf %72, %77 : vector<16x256xf32>
    %79 = vector.extract_strided_slice %71 {offsets = [16, 0], sizes = [16, 256], strides = [1, 1]} : vector<80x256xf32> to vector<16x256xf32>
    %c8_i32_19 = arith.constant 8 : i32
    %80 = tpu.dynamic_rotate %79 by %c8_i32_19 dim 1 : vector<16x256xf32>, i32 -> vector<16x256xf32>
    %81 = vector.extract_strided_slice %0 {offsets = [1, 0], sizes = [1, 256], strides = [1, 1]} : vector<8x256xf32> to vector<1x256xf32>
    %82 = vector.broadcast %81 : vector<1x256xf32> to vector<16x256xf32>
    %83 = arith.mulf %80, %82 : vector<16x256xf32>
    %84 = arith.addf %78, %83 : vector<16x256xf32>
    %85 = vector.extract_strided_slice %71 {offsets = [48, 0], sizes = [16, 256], strides = [1, 1]} : vector<80x256xf32> to vector<16x256xf32>
    %c248_i32_20 = arith.constant 248 : i32
    %86 = tpu.dynamic_rotate %85 by %c248_i32_20 dim 1 : vector<16x256xf32>, i32 -> vector<16x256xf32>
    %87 = vector.extract_strided_slice %0 {offsets = [3, 0], sizes = [1, 256], strides = [1, 1]} : vector<8x256xf32> to vector<1x256xf32>
    %88 = vector.broadcast %87 : vector<1x256xf32> to vector<16x256xf32>
    %89 = arith.mulf %86, %88 : vector<16x256xf32>
    %90 = arith.addf %84, %89 : vector<16x256xf32>
    %91 = vector.extract_strided_slice %71 {offsets = [64, 0], sizes = [16, 256], strides = [1, 1]} : vector<80x256xf32> to vector<16x256xf32>
    %c240_i32_21 = arith.constant 240 : i32
    %92 = tpu.dynamic_rotate %91 by %c240_i32_21 dim 1 : vector<16x256xf32>, i32 -> vector<16x256xf32>
    %93 = vector.extract_strided_slice %0 {offsets = [4, 0], sizes = [1, 256], strides = [1, 1]} : vector<8x256xf32> to vector<1x256xf32>
    %94 = vector.broadcast %93 : vector<1x256xf32> to vector<16x256xf32>
    %95 = arith.mulf %92, %94 : vector<16x256xf32>
    %96 = arith.addf %90, %95 : vector<16x256xf32>
    %97 = arith.addf %96, %68 : vector<16x256xf32>
    %cst_22 = arith.constant 0.000000e+00 : f32
    %98 = vector.broadcast %cst_22 : f32 to vector<16x256xf32>
    %99 = arith.maximumf %97, %98 : vector<16x256xf32>
    %cst_23 = arith.constant 1.99999499 : f32
    %100 = vector.broadcast %cst_23 : f32 to vector<16x256xf32>
    %101 = arith.mulf %99, %100 : vector<16x256xf32>
    %102 = arith.truncf %101 : vector<16x256xf32> to vector<16x256xbf16>
    %c240 = arith.constant 240 : index
    %c0_24 = arith.constant 0 : index
    %103 = vector.load %arg1[%c240, %c0_24] : memref<352x16xbf16, #tpu.memory_space<vmem>>, vector<32x16xbf16>
    %cst_25 = arith.constant dense<0.000000e+00> : vector<32x256xf32>
    %104 = tpu.matmul %103, %102, %cst_25 {dimension_numbers = #tpu.dot_dimension_numbers<[1], [0], [0], [1], [0, 0, 1, 1], [], []>} : vector<32x16xbf16>, vector<16x256xbf16>, vector<32x256xf32> -> vector<32x256xf32>
    %105 = vector.extract_strided_slice %104 {offsets = [16, 0], sizes = [16, 256], strides = [1, 1]} : vector<32x256xf32> to vector<16x256xf32>
    %106 = vector.extract_strided_slice %104 {offsets = [0, 0], sizes = [16, 256], strides = [1, 1]} : vector<32x256xf32> to vector<16x256xf32>
    %c1_i32_26 = arith.constant 1 : i32
    %107 = tpu.dynamic_rotate %105 by %c1_i32_26 dim 1 : vector<16x256xf32>, i32 -> vector<16x256xf32>
    %108 = vector.broadcast %1 : vector<1x256xf32> to vector<16x256xf32>
    %109 = arith.mulf %107, %108 : vector<16x256xf32>
    %110 = arith.addf %106, %109 : vector<16x256xf32>
    %c255_i32_27 = arith.constant 255 : i32
    %111 = tpu.dynamic_rotate %105 by %c255_i32_27 dim 1 : vector<16x256xf32>, i32 -> vector<16x256xf32>
    %112 = vector.broadcast %2 : vector<1x256xf32> to vector<16x256xf32>
    %113 = arith.mulf %111, %112 : vector<16x256xf32>
    %114 = arith.addf %110, %113 : vector<16x256xf32>
    %115 = arith.addf %114, %101 : vector<16x256xf32>
    %cst_28 = arith.constant 0.000000e+00 : f32
    %116 = vector.broadcast %cst_28 : f32 to vector<16x256xf32>
    %117 = arith.maximumf %115, %116 : vector<16x256xf32>
    %118 = arith.truncf %117 : vector<16x256xf32> to vector<16x256xbf16>
    %c272 = arith.constant 272 : index
    %c0_29 = arith.constant 0 : index
    %119 = vector.load %arg1[%c272, %c0_29] : memref<352x16xbf16, #tpu.memory_space<vmem>>, vector<80x16xbf16>
    %cst_30 = arith.constant dense<0.000000e+00> : vector<80x256xf32>
    %120 = tpu.matmul %119, %118, %cst_30 {dimension_numbers = #tpu.dot_dimension_numbers<[1], [0], [0], [1], [0, 0, 1, 1], [], []>} : vector<80x16xbf16>, vector<16x256xbf16>, vector<80x256xf32> -> vector<80x256xf32>
    %121 = vector.extract_strided_slice %120 {offsets = [32, 0], sizes = [16, 256], strides = [1, 1]} : vector<80x256xf32> to vector<16x256xf32>
    %122 = vector.extract_strided_slice %120 {offsets = [0, 0], sizes = [16, 256], strides = [1, 1]} : vector<80x256xf32> to vector<16x256xf32>
    %c16_i32_31 = arith.constant 16 : i32
    %123 = tpu.dynamic_rotate %122 by %c16_i32_31 dim 1 : vector<16x256xf32>, i32 -> vector<16x256xf32>
    %124 = vector.extract_strided_slice %0 {offsets = [0, 0], sizes = [1, 256], strides = [1, 1]} : vector<8x256xf32> to vector<1x256xf32>
    %125 = vector.broadcast %124 : vector<1x256xf32> to vector<16x256xf32>
    %126 = arith.mulf %123, %125 : vector<16x256xf32>
    %127 = arith.addf %121, %126 : vector<16x256xf32>
    %128 = vector.extract_strided_slice %120 {offsets = [16, 0], sizes = [16, 256], strides = [1, 1]} : vector<80x256xf32> to vector<16x256xf32>
    %c8_i32_32 = arith.constant 8 : i32
    %129 = tpu.dynamic_rotate %128 by %c8_i32_32 dim 1 : vector<16x256xf32>, i32 -> vector<16x256xf32>
    %130 = vector.extract_strided_slice %0 {offsets = [1, 0], sizes = [1, 256], strides = [1, 1]} : vector<8x256xf32> to vector<1x256xf32>
    %131 = vector.broadcast %130 : vector<1x256xf32> to vector<16x256xf32>
    %132 = arith.mulf %129, %131 : vector<16x256xf32>
    %133 = arith.addf %127, %132 : vector<16x256xf32>
    %134 = vector.extract_strided_slice %120 {offsets = [48, 0], sizes = [16, 256], strides = [1, 1]} : vector<80x256xf32> to vector<16x256xf32>
    %c248_i32_33 = arith.constant 248 : i32
    %135 = tpu.dynamic_rotate %134 by %c248_i32_33 dim 1 : vector<16x256xf32>, i32 -> vector<16x256xf32>
    %136 = vector.extract_strided_slice %0 {offsets = [3, 0], sizes = [1, 256], strides = [1, 1]} : vector<8x256xf32> to vector<1x256xf32>
    %137 = vector.broadcast %136 : vector<1x256xf32> to vector<16x256xf32>
    %138 = arith.mulf %135, %137 : vector<16x256xf32>
    %139 = arith.addf %133, %138 : vector<16x256xf32>
    %140 = vector.extract_strided_slice %120 {offsets = [64, 0], sizes = [16, 256], strides = [1, 1]} : vector<80x256xf32> to vector<16x256xf32>
    %c240_i32_34 = arith.constant 240 : i32
    %141 = tpu.dynamic_rotate %140 by %c240_i32_34 dim 1 : vector<16x256xf32>, i32 -> vector<16x256xf32>
    %142 = vector.extract_strided_slice %0 {offsets = [4, 0], sizes = [1, 256], strides = [1, 1]} : vector<8x256xf32> to vector<1x256xf32>
    %143 = vector.broadcast %142 : vector<1x256xf32> to vector<16x256xf32>
    %144 = arith.mulf %141, %143 : vector<16x256xf32>
    %145 = arith.addf %139, %144 : vector<16x256xf32>
    %146 = arith.addf %145, %117 : vector<16x256xf32>
    %cst_35 = arith.constant 0.000000e+00 : f32
    %147 = vector.broadcast %cst_35 : f32 to vector<16x256xf32>
    %148 = arith.maximumf %146, %147 : vector<16x256xf32>
    %cst_36 = arith.constant 1.99999499 : f32
    %149 = vector.broadcast %cst_36 : f32 to vector<16x256xf32>
    %150 = arith.mulf %148, %149 : vector<16x256xf32>
    %c0_37 = arith.constant 0 : index
    %c0_38 = arith.constant 0 : index
    %151 = vector.load %arg5[%c0_37, %c0_38] : memref<16x256xf32, #tpu.memory_space<vmem>>, vector<16x256xf32>
    tpu.vector_store %arg5[%c0_37, %c0_38], %150 {strides = array<i32>} : memref<16x256xf32, #tpu.memory_space<vmem>>, vector<16x256xf32>,
    %c0_39 = arith.constant 0 : index
    %c0_40 = arith.constant 0 : index
    %152 = vector.load %arg3[%c0_39, %c0_40] : memref<256x2xf32, #tpu.memory_space<vmem>>, vector<256x2xf32>
    %cst_41 = arith.constant dense<0.000000e+00> : vector<16x2xf32>
    %153 = tpu.matmul %150, %152, %cst_41 {dimension_numbers = #tpu.dot_dimension_numbers<[1], [0], [0], [1], [0, 0, 1, 1], [], []>} : vector<16x256xf32>, vector<256x2xf32>, vector<16x2xf32> -> vector<16x2xf32>
    %c0_42 = arith.constant 0 : index
    %c0_43 = arith.constant 0 : index
    %154 = vector.load %arg4[%c0_42, %c0_43] : memref<10x16xf32, #tpu.memory_space<vmem>>, vector<10x16xf32>
    %cst_44 = arith.constant dense<0.000000e+00> : vector<10x2xf32>
    %155 = tpu.matmul %154, %153, %cst_44 {dimension_numbers = #tpu.dot_dimension_numbers<[1], [0], [0], [1], [0, 0, 1, 1], [], []>} : vector<10x16xf32>, vector<16x2xf32>, vector<10x2xf32> -> vector<10x2xf32>
    %c0_45 = arith.constant 0 : index
    %c0_46 = arith.constant 0 : index
    %156 = vector.load %arg6[%c0_45, %c0_46] : memref<10x2xf32, #tpu.memory_space<vmem>>, vector<10x2xf32>
    tpu.vector_store %arg6[%c0_45, %c0_46], %155 {strides = array<i32>} : memref<10x2xf32, #tpu.memory_space<vmem>>, vector<10x2xf32>,
    return
  }
}

</mosaic_0001>

<llo_original>
// kernel: forward.1
$region0: #{forward.1}
  #allocation0 [shape = 'u32[]', space=smem, size = 0x4, offset = 0x4, fixed_abs, tag = 'smem constant byte address 0x4 - core index']
  #allocation1 [shape = 'u32[72,128]{1,0:T(1,128)}', space=vmem, size = 0x9000, scoped, tag = 'internal scratch']
  %s0 = inlined_call_operand.vmem [shape: f32[16,256], index: 0, kind: input, shape index: {}]
  %s1 = inlined_call_operand.vmem [shape: bf16[352,16], index: 1, kind: input, shape index: {}]
  %s2 = inlined_call_operand.vmem [shape: f32[8,256], index: 2, kind: input, shape index: {}]
  %s3 = inlined_call_operand.vmem [shape: f32[256,2], index: 3, kind: input, shape index: {}]
  %s4 = inlined_call_operand.vmem [shape: f32[10,16], index: 4, kind: input, shape index: {}]
  %s5 = inlined_call_operand.vmem [shape: f32[16,256], index: 5, kind: output, shape index: {0}]
  %s6 = inlined_call_operand.vmem [shape: f32[10,2], index: 6, kind: output, shape index: {1}]
  %7 = xla_tuple %s5, %s6
  %s8 = sld [smem:[#allocation0]]
  $region38: #{forward.1} parent=0
    _
  %s10 = ssub.s32 1, %s8
  %s11 = scalar_select 0, %s10, %s8
  // Predicated region
  $region2: #{forward.1} parent=0 // pred_check
    _
  $region3: #{forward.1} parent=0 // pred_check_branch
    %13 = sbr.rel (0) target = $region5
  $region4: #{forward.1} parent=0 // pred_region
    _
  $region5: #{forward.1} parent=0 // pred_fallthru
    _
  // Predicated region
  $region6: #{forward.1} parent=0 // pred_check
    _
  $region7: #{forward.1} parent=0 // pred_check_branch
    %15 = sbr.rel (0) target = $region9
  $region8: #{forward.1} parent=0 // pred_region
    _
  $region9: #{forward.1} parent=0 // pred_fallthru
    _
  // Predicated region
  $region10: #{forward.1} parent=0 // pred_check
    _
  $region11: #{forward.1} parent=0 // pred_check_branch
    %17 = sbr.rel (0) target = $region13
  $region12: #{forward.1} parent=0 // pred_region
    _
  $region13: #{forward.1} parent=0 // pred_fallthru
    _
  // Predicated region
  $region14: #{forward.1} parent=0 // pred_check
    _
  $region15: #{forward.1} parent=0 // pred_check_branch
    %19 = sbr.rel (0) target = $region17
  $region16: #{forward.1} parent=0 // pred_region
    _
  $region17: #{forward.1} parent=0 // pred_fallthru
    _
  // Predicated region
  $region18: #{forward.1} parent=0 // pred_check
    _
  $region19: #{forward.1} parent=0 // pred_check_branch
    %21 = sbr.rel (0) target = $region21
  $region20: #{forward.1} parent=0 // pred_region
    _
  $region21: #{forward.1} parent=0 // pred_fallthru
    _
  %v23 = vld [vmem:[%s2] sm:$0xff]
  %v24 = vld [vmem:[%s2 + $0x8] sm:$0xff]
  %v25 = vld [vmem:[%s0] sm:$0xff]
  %v26 = vld [vmem:[%s0 + $0x8] sm:$0xff]
  %v27 = vld [vmem:[%s0 + $0x10] sm:$0xff]
  %v28 = vld [vmem:[%s0 + $0x18] sm:$0xff]
  %v29 = vpack.c.bf16 %v27, %v25
  %v30 = vpack.c.bf16 %v28, %v26
  %v31 = vld [vmem:[%s1] sm:$0xf]
  %v32 = vld [vmem:[%s1 + $0x4] sm:$0xf]
  %v33 = vld [vmem:[%s1 + $0x8] sm:$0xf]
  %v34 = vld [vmem:[%s1 + $0xc] sm:$0xf]
  %v39 = vunpack.c.l.b16 %v31
  %v40 = vunpack.c.l.b16 %v32
  %v41 = vunpack.c.l.b16 %v33
  %v42 = vunpack.c.l.b16 %v34
  %v43 = vpack.c.b16 %v40, %v39
  %v44 = vpack.c.b16 %v42, %v41
  %vm45 = vcmask 130048
  %v47 = vsel %vm45, %v43, 0
  %v50 = vsel %vm45, %v44, 0
  %52 = vmatpush.bf16.msra.mxu0 0
  %53 = vmatpush.bf16.msra.mxu0 0
  %54 = vmatpush.bf16.msra.mxu0 0
  %55 = vmatpush.bf16.msra.mxu0 0
  %56 = vmatpush.bf16.msra.mxu0 0
  %57 = vmatpush.bf16.msra.mxu0 0
  %58 = vmatpush.bf16.msra.mxu0 0
  %59 = vmatpush.bf16.msra.mxu0 %v29
  %60 = vmatmul.bf16.gmra.mxu0 %v47
  %v61 = vpop.f32.mrf.mxu0
  %v62 = vadd.f32 0.0, %v61
  %v63 = vpop.f32.mrf.mxu0
  %v64 = vadd.f32 0.0, %v63
  %65 = vmatmul.bf16.gmra.mxu0 %v50
  %v66 = vpop.f32.mrf.mxu0
  %v67 = vadd.f32 0.0, %v66
  %v68 = vpop.f32.mrf.mxu0
  %v69 = vadd.f32 0.0, %v68
  %70 = vdwg.mxu0
  %71 = vmatpush.bf16.msra.mxu0 0
  %72 = vmatpush.bf16.msra.mxu0 0
  %73 = vmatpush.bf16.msra.mxu0 0
  %74 = vmatpush.bf16.msra.mxu0 0
  %75 = vmatpush.bf16.msra.mxu0 0
  %76 = vmatpush.bf16.msra.mxu0 0
  %77 = vmatpush.bf16.msra.mxu0 0
  %78 = vmatpush.bf16.msra.mxu0 %v30
  %79 = vmatmul.bf16.gmra.mxu0 %v47
  %v80 = vpop.f32.mrf.mxu0
  %v81 = vadd.f32 0.0, %v80
  %v82 = vpop.f32.mrf.mxu0
  %v83 = vadd.f32 0.0, %v82
  %84 = vmatmul.bf16.gmra.mxu0 %v50
  %v85 = vpop.f32.mrf.mxu0
  %v86 = vadd.f32 0.0, %v85
  %v87 = vpop.f32.mrf.mxu0
  %v88 = vadd.f32 0.0, %v87
  %89 = vdwg.mxu0
  %90 = vrot.lane.b32.xlu0 %v67, 1
  %v91 = vpop.permute.xlu0 %90
  %92 = vrot.lane.b32.xlu0 %v69, 1
  %v93 = vpop.permute.xlu0 %92
  %94 = vrot.lane.b32.xlu0 %v86, 1
  %v95 = vpop.permute.xlu0 %94
  %96 = vrot.lane.b32.xlu0 %v88, 1
  %v97 = vpop.permute.xlu0 %96
  %v98 = vlaneseq
  %v99 = vand.u32 %v98, 127
  %vm100 = vcmp.lt.s32.totalorder %v99, 1
  %v101 = vsel %vm100, %v91, %v95
  %v102 = vsel %vm100, %v93, %v97
  %v103 = vsel %vm100, %v95, %v91
  %v104 = vsel %vm100, %v97, %v93
  %v105 = vperm.slane %v23, 5
  %v106 = vperm.slane %v24, 5
  %v107 = vmul.f32 %v103, %v105
  %v108 = vmul.f32 %v101, %v106
  %v109 = vmul.f32 %v104, %v105
  %v110 = vmul.f32 %v102, %v106
  %v111 = vadd.f32 %v62, %v107
  %v112 = vadd.f32 %v81, %v108
  %v113 = vadd.f32 %v64, %v109
  %v114 = vadd.f32 %v83, %v110
  %115 = vrot.lane.b32.xlu0 %v67, 127
  %v116 = vpop.permute.xlu0 %115
  %117 = vrot.lane.b32.xlu0 %v69, 127
  %v118 = vpop.permute.xlu0 %117
  %119 = vrot.lane.b32.xlu0 %v86, 127
  %v120 = vpop.permute.xlu0 %119
  %121 = vrot.lane.b32.xlu0 %v88, 127
  %v122 = vpop.permute.xlu0 %121
  %vm123 = vcmp.lt.s32.totalorder %v99, 127
  %v124 = vsel %vm123, %v116, %v120
  %v125 = vsel %vm123, %v118, %v122
  %v126 = vsel %vm123, %v120, %v116
  %v127 = vsel %vm123, %v122, %v118
  %v128 = vperm.slane %v23, 6
  %v129 = vperm.slane %v24, 6
  %v130 = vmul.f32 %v124, %v128
  %v131 = vmul.f32 %v126, %v129
  %v132 = vmul.f32 %v125, %v128
  %v133 = vmul.f32 %v127, %v129
  %v134 = vadd.f32 %v111, %v130
  %v135 = vadd.f32 %v112, %v131
  %v136 = vadd.f32 %v113, %v132
  %v137 = vadd.f32 %v114, %v133
  %v138 = vld [vmem:[%s1 + $0x10] sm:$0xf]
  %v139 = vld [vmem:[%s1 + $0x14] sm:$0xf]
  %v142 = vunpack.c.l.b16 %v138
  %v143 = vunpack.c.l.b16 %v139
  %v144 = vpack.c.b16 %v143, %v142
  %v146 = vsel %vm45, %v144, 0
  %148 = vmatpush.bf16.msra.mxu0 0
  %149 = vmatpush.bf16.msra.mxu0 0
  %150 = vmatpush.bf16.msra.mxu0 0
  %151 = vmatpush.bf16.msra.mxu0 0
  %152 = vmatpush.bf16.msra.mxu0 0
  %153 = vmatpush.bf16.msra.mxu0 0
  %154 = vmatpush.bf16.msra.mxu0 0
  %155 = vmatpush.bf16.msra.mxu0 %v29
  %156 = vmatmul.bf16.gmra.mxu0 %v146
  %v157 = vpop.f32.mrf.mxu0
  %v158 = vadd.f32 0.0, %v157
  %v159 = vpop.f32.mrf.mxu0
  %v160 = vadd.f32 0.0, %v159
  %161 = vdwg.mxu0
  %162 = vmatpush.bf16.msra.mxu0 0
  %163 = vmatpush.bf16.msra.mxu0 0
  %164 = vmatpush.bf16.msra.mxu0 0
  %165 = vmatpush.bf16.msra.mxu0 0
  %166 = vmatpush.bf16.msra.mxu0 0
  %167 = vmatpush.bf16.msra.mxu0 0
  %168 = vmatpush.bf16.msra.mxu0 0
  %169 = vmatpush.bf16.msra.mxu0 %v30
  %170 = vmatmul.bf16.gmra.mxu0 %v146
  %v171 = vpop.f32.mrf.mxu0
  %v172 = vadd.f32 0.0, %v171
  %v173 = vpop.f32.mrf.mxu0
  %v174 = vadd.f32 0.0, %v173
  %175 = vdwg.mxu0
  %v176 = vadd.f32 %v134, %v158
  %v177 = vadd.f32 %v135, %v172
  %v178 = vadd.f32 %v136, %v160
  %v179 = vadd.f32 %v137, %v174
  %v180 = vmax.f32 %v176, 0.0
  %v181 = vmax.f32 %v177, 0.0
  %v182 = vmax.f32 %v178, 0.0
  %v183 = vmax.f32 %v179, 0.0
  %v184 = vpack.c.bf16 %v182, %v180
  %v185 = vpack.c.bf16 %v183, %v181
  %v186 = vld [vmem:[%s1 + $0x18] sm:$0xf]
  %v187 = vld [vmem:[%s1 + $0x1c] sm:$0xf]
  %v188 = vld [vmem:[%s1 + $0x20] sm:$0xf]
  %v189 = vld [vmem:[%s1 + $0x24] sm:$0xf]
  %v190 = vld [vmem:[%s1 + $0x28] sm:$0xf]
  %v191 = vld [vmem:[%s1 + $0x2c] sm:$0xf]
  %v192 = vld [vmem:[%s1 + $0x30] sm:$0xf]
  %v193 = vld [vmem:[%s1 + $0x34] sm:$0xf]
  %v194 = vld [vmem:[%s1 + $0x38] sm:$0xf]
  %v195 = vld [vmem:[%s1 + $0x3c] sm:$0xf]
  %v206 = vunpack.c.l.b16 %v186
  %v207 = vunpack.c.l.b16 %v187
  %v208 = vunpack.c.l.b16 %v188
  %v209 = vunpack.c.l.b16 %v189
  %v210 = vunpack.c.l.b16 %v190
  %v211 = vunpack.c.l.b16 %v191
  %v212 = vunpack.c.l.b16 %v192
  %v213 = vunpack.c.l.b16 %v193
  %v214 = vunpack.c.l.b16 %v194
  %v215 = vunpack.c.l.b16 %v195
  %v216 = vpack.c.b16 %v207, %v206
  %v217 = vpack.c.b16 %v209, %v208
  %v218 = vpack.c.b16 %v211, %v210
  %v219 = vpack.c.b16 %v213, %v212
  %v220 = vpack.c.b16 %v215, %v214
  %v222 = vsel %vm45, %v216, 0
  %v225 = vsel %vm45, %v217, 0
  %v228 = vsel %vm45, %v218, 0
  %v231 = vsel %vm45, %v219, 0
  %v234 = vsel %vm45, %v220, 0
  %236 = vmatpush.bf16.msra.mxu0 0
  %237 = vmatpush.bf16.msra.mxu0 0
  %238 = vmatpush.bf16.msra.mxu0 0
  %239 = vmatpush.bf16.msra.mxu0 0
  %240 = vmatpush.bf16.msra.mxu0 0
  %241 = vmatpush.bf16.msra.mxu0 0
  %242 = vmatpush.bf16.msra.mxu0 0
  %243 = vmatpush.bf16.msra.mxu0 %v184
  %244 = vmatmul.bf16.gmra.mxu0 %v222
  %v245 = vpop.f32.mrf.mxu0
  %v246 = vadd.f32 0.0, %v245
  %v247 = vpop.f32.mrf.mxu0
  %v248 = vadd.f32 0.0, %v247
  %249 = vmatmul.bf16.gmra.mxu0 %v225
  %v250 = vpop.f32.mrf.mxu0
  %v251 = vadd.f32 0.0, %v250
  %v252 = vpop.f32.mrf.mxu0
  %v253 = vadd.f32 0.0, %v252
  %254 = vmatmul.bf16.gmra.mxu0 %v228
  %v255 = vpop.f32.mrf.mxu0
  %v256 = vadd.f32 0.0, %v255
  %v257 = vpop.f32.mrf.mxu0
  %v258 = vadd.f32 0.0, %v257
  %259 = vmatmul.bf16.gmra.mxu0 %v231
  %v260 = vpop.f32.mrf.mxu0
  %v261 = vadd.f32 0.0, %v260
  %v262 = vpop.f32.mrf.mxu0
  %v263 = vadd.f32 0.0, %v262
  %264 = vmatmul.bf16.gmra.mxu0 %v234
  %v265 = vpop.f32.mrf.mxu0
  %v266 = vadd.f32 0.0, %v265
  %v267 = vpop.f32.mrf.mxu0
  %v268 = vadd.f32 0.0, %v267
  %269 = vdwg.mxu0
  %270 = vmatpush.bf16.msra.mxu0 0
  %271 = vmatpush.bf16.msra.mxu0 0
  %272 = vmatpush.bf16.msra.mxu0 0
  %273 = vmatpush.bf16.msra.mxu0 0
  %274 = vmatpush.bf16.msra.mxu0 0
  %275 = vmatpush.bf16.msra.mxu0 0
  %276 = vmatpush.bf16.msra.mxu0 0
  %277 = vmatpush.bf16.msra.mxu0 %v185
  %278 = vmatmul.bf16.gmra.mxu0 %v222
  %v279 = vpop.f32.mrf.mxu0
  %v280 = vadd.f32 0.0, %v279
  %v281 = vpop.f32.mrf.mxu0
  %v282 = vadd.f32 0.0, %v281
  %283 = vmatmul.bf16.gmra.mxu0 %v225
  %v284 = vpop.f32.mrf.mxu0
  %v285 = vadd.f32 0.0, %v284
  %v286 = vpop.f32.mrf.mxu0
  %v287 = vadd.f32 0.0, %v286
  %288 = vmatmul.bf16.gmra.mxu0 %v228
  %v289 = vpop.f32.mrf.mxu0
  %v290 = vadd.f32 0.0, %v289
  %v291 = vpop.f32.mrf.mxu0
  %v292 = vadd.f32 0.0, %v291
  %293 = vmatmul.bf16.gmra.mxu0 %v231
  %v294 = vpop.f32.mrf.mxu0
  %v295 = vadd.f32 0.0, %v294
  %v296 = vpop.f32.mrf.mxu0
  %v297 = vadd.f32 0.0, %v296
  %298 = vmatmul.bf16.gmra.mxu0 %v234
  %v299 = vpop.f32.mrf.mxu0
  %v300 = vadd.f32 0.0, %v299
  %v301 = vpop.f32.mrf.mxu0
  %v302 = vadd.f32 0.0, %v301
  %303 = vdwg.mxu0
  %304 = vrot.lane.b32.xlu0 %v246, 16
  %v305 = vpop.permute.xlu0 %304
  %306 = vrot.lane.b32.xlu0 %v248, 16
  %v307 = vpop.permute.xlu0 %306
  %308 = vrot.lane.b32.xlu0 %v280, 16
  %v309 = vpop.permute.xlu0 %308
  %310 = vrot.lane.b32.xlu0 %v282, 16
  %v311 = vpop.permute.xlu0 %310
  %vm312 = vcmp.lt.s32.totalorder %v99, 16
  %v313 = vsel %vm312, %v305, %v309
  %v314 = vsel %vm312, %v307, %v311
  %v315 = vsel %vm312, %v309, %v305
  %v316 = vsel %vm312, %v311, %v307
  %v317 = vperm.slane %v23, 0
  %v318 = vperm.slane %v24, 0
  %v319 = vmul.f32 %v315, %v317
  %v320 = vmul.f32 %v313, %v318
  %v321 = vmul.f32 %v316, %v317
  %v322 = vmul.f32 %v314, %v318
  %v323 = vadd.f32 %v256, %v319
  %v324 = vadd.f32 %v290, %v320
  %v325 = vadd.f32 %v258, %v321
  %v326 = vadd.f32 %v292, %v322
  %327 = vrot.lane.b32.xlu0 %v251, 8
  %v328 = vpop.permute.xlu0 %327
  %329 = vrot.lane.b32.xlu0 %v253, 8
  %v330 = vpop.permute.xlu0 %329
  %331 = vrot.lane.b32.xlu0 %v285, 8
  %v332 = vpop.permute.xlu0 %331
  %333 = vrot.lane.b32.xlu0 %v287, 8
  %v334 = vpop.permute.xlu0 %333
  %vm335 = vcmp.lt.s32.totalorder %v99, 8
  %v336 = vsel %vm335, %v328, %v332
  %v337 = vsel %vm335, %v330, %v334
  %v338 = vsel %vm335, %v332, %v328
  %v339 = vsel %vm335, %v334, %v330
  %v340 = vperm.slane %v23, 1
  %v341 = vperm.slane %v24, 1
  %v342 = vmul.f32 %v338, %v340
  %v343 = vmul.f32 %v336, %v341
  %v344 = vmul.f32 %v339, %v340
  %v345 = vmul.f32 %v337, %v341
  %v346 = vadd.f32 %v323, %v342
  %v347 = vadd.f32 %v324, %v343
  %v348 = vadd.f32 %v325, %v344
  %v349 = vadd.f32 %v326, %v345
  %350 = vrot.lane.b32.xlu0 %v261, 120
  %v351 = vpop.permute.xlu0 %350
  %352 = vrot.lane.b32.xlu0 %v263, 120
  %v353 = vpop.permute.xlu0 %352
  %354 = vrot.lane.b32.xlu0 %v295, 120
  %v355 = vpop.permute.xlu0 %354
  %356 = vrot.lane.b32.xlu0 %v297, 120
  %v357 = vpop.permute.xlu0 %356
  %vm358 = vcmp.lt.s32.totalorder %v99, 120
  %v359 = vsel %vm358, %v351, %v355
  %v360 = vsel %vm358, %v353, %v357
  %v361 = vsel %vm358, %v355, %v351
  %v362 = vsel %vm358, %v357, %v353
  %v363 = vperm.slane %v23, 3
  %v364 = vperm.slane %v24, 3
  %v365 = vmul.f32 %v359, %v363
  %v366 = vmul.f32 %v361, %v364
  %v367 = vmul.f32 %v360, %v363
  %v368 = vmul.f32 %v362, %v364
  %v369 = vadd.f32 %v346, %v365
  %v370 = vadd.f32 %v347, %v366
  %v371 = vadd.f32 %v348, %v367
  %v372 = vadd.f32 %v349, %v368
  %373 = vrot.lane.b32.xlu0 %v266, 112
  %v374 = vpop.permute.xlu0 %373
  %375 = vrot.lane.b32.xlu0 %v268, 112
  %v376 = vpop.permute.xlu0 %375
  %377 = vrot.lane.b32.xlu0 %v300, 112
  %v378 = vpop.permute.xlu0 %377
  %379 = vrot.lane.b32.xlu0 %v302, 112
  %v380 = vpop.permute.xlu0 %379
  %vm381 = vcmp.lt.s32.totalorder %v99, 112
  %v382 = vsel %vm381, %v374, %v378
  %v383 = vsel %vm381, %v376, %v380
  %v384 = vsel %vm381, %v378, %v374
  %v385 = vsel %vm381, %v380, %v376
  %v386 = vperm.slane %v23, 4
  %v387 = vperm.slane %v24, 4
  %v388 = vmul.f32 %v382, %v386
  %v389 = vmul.f32 %v384, %v387
  %v390 = vmul.f32 %v383, %v386
  %v391 = vmul.f32 %v385, %v387
  %v392 = vadd.f32 %v369, %v388
  %v393 = vadd.f32 %v370, %v389
  %v394 = vadd.f32 %v371, %v390
  %v395 = vadd.f32 %v372, %v391
  %v396 = vadd.f32 %v392, %v180
  %v397 = vadd.f32 %v393, %v181
  %v398 = vadd.f32 %v394, %v182
  %v399 = vadd.f32 %v395, %v183
  %v400 = vmax.f32 %v396, 0.0
  %v401 = vmax.f32 %v397, 0.0
  %v402 = vmax.f32 %v398, 0.0
  %v403 = vmax.f32 %v399, 0.0
  %v404 = vpack.c.bf16 %v402, %v400
  %v405 = vpack.c.bf16 %v403, %v401
  %v406 = vld [vmem:[%s1 + $0x40] sm:$0xf]
  %v407 = vld [vmem:[%s1 + $0x44] sm:$0xf]
  %v408 = vld [vmem:[%s1 + $0x48] sm:$0xf]
  %v409 = vld [vmem:[%s1 + $0x4c] sm:$0xf]
  %v414 = vunpack.c.l.b16 %v406
  %v415 = vunpack.c.l.b16 %v407
  %v416 = vunpack.c.l.b16 %v408
  %v417 = vunpack.c.l.b16 %v409
  %v418 = vpack.c.b16 %v415, %v414
  %v419 = vpack.c.b16 %v417, %v416
  %v421 = vsel %vm45, %v418, 0
  %v424 = vsel %vm45, %v419, 0
  %426 = vmatpush.bf16.msra.mxu0 0
  %427 = vmatpush.bf16.msra.mxu0 0
  %428 = vmatpush.bf16.msra.mxu0 0
  %429 = vmatpush.bf16.msra.mxu0 0
  %430 = vmatpush.bf16.msra.mxu0 0
  %431 = vmatpush.bf16.msra.mxu0 0
  %432 = vmatpush.bf16.msra.mxu0 0
  %433 = vmatpush.bf16.msra.mxu0 %v404
  %434 = vmatmul.bf16.gmra.mxu0 %v421
  %v435 = vpop.f32.mrf.mxu0
  %v436 = vadd.f32 0.0, %v435
  %v437 = vpop.f32.mrf.mxu0
  %v438 = vadd.f32 0.0, %v437
  %439 = vmatmul.bf16.gmra.mxu0 %v424
  %v440 = vpop.f32.mrf.mxu0
  %v441 = vadd.f32 0.0, %v440
  %v442 = vpop.f32.mrf.mxu0
  %v443 = vadd.f32 0.0, %v442
  %444 = vdwg.mxu0
  %445 = vmatpush.bf16.msra.mxu0 0
  %446 = vmatpush.bf16.msra.mxu0 0
  %447 = vmatpush.bf16.msra.mxu0 0
  %448 = vmatpush.bf16.msra.mxu0 0
  %449 = vmatpush.bf16.msra.mxu0 0
  %450 = vmatpush.bf16.msra.mxu0 0
  %451 = vmatpush.bf16.msra.mxu0 0
  %452 = vmatpush.bf16.msra.mxu0 %v405
  %453 = vmatmul.bf16.gmra.mxu0 %v421
  %v454 = vpop.f32.mrf.mxu0
  %v455 = vadd.f32 0.0, %v454
  %v456 = vpop.f32.mrf.mxu0
  %v457 = vadd.f32 0.0, %v456
  %458 = vmatmul.bf16.gmra.mxu0 %v424
  %v459 = vpop.f32.mrf.mxu0
  %v460 = vadd.f32 0.0, %v459
  %v461 = vpop.f32.mrf.mxu0
  %v462 = vadd.f32 0.0, %v461
  %463 = vdwg.mxu0
  %464 = vrot.lane.b32.xlu0 %v441, 1
  %v465 = vpop.permute.xlu0 %464
  %466 = vrot.lane.b32.xlu0 %v443, 1
  %v467 = vpop.permute.xlu0 %466
  %468 = vrot.lane.b32.xlu0 %v460, 1
  %v469 = vpop.permute.xlu0 %468
  %470 = vrot.lane.b32.xlu0 %v462, 1
  %v471 = vpop.permute.xlu0 %470
  %v472 = vsel %vm100, %v465, %v469
  %v473 = vsel %vm100, %v467, %v471
  %v474 = vsel %vm100, %v469, %v465
  %v475 = vsel %vm100, %v471, %v467
  %v476 = vmul.f32 %v474, %v105
  %v477 = vmul.f32 %v472, %v106
  %v478 = vmul.f32 %v475, %v105
  %v479 = vmul.f32 %v473, %v106
  %v480 = vadd.f32 %v436, %v476
  %v481 = vadd.f32 %v455, %v477
  %v482 = vadd.f32 %v438, %v478
  %v483 = vadd.f32 %v457, %v479
  %484 = vrot.lane.b32.xlu0 %v441, 127
  %v485 = vpop.permute.xlu0 %484
  %486 = vrot.lane.b32.xlu0 %v443, 127
  %v487 = vpop.permute.xlu0 %486
  %488 = vrot.lane.b32.xlu0 %v460, 127
  %v489 = vpop.permute.xlu0 %488
  %490 = vrot.lane.b32.xlu0 %v462, 127
  %v491 = vpop.permute.xlu0 %490
  %v492 = vsel %vm123, %v485, %v489
  %v493 = vsel %vm123, %v487, %v491
  %v494 = vsel %vm123, %v489, %v485
  %v495 = vsel %vm123, %v491, %v487
  %v496 = vmul.f32 %v492, %v128
  %v497 = vmul.f32 %v494, %v129
  %v498 = vmul.f32 %v493, %v128
  %v499 = vmul.f32 %v495, %v129
  %v500 = vadd.f32 %v480, %v496
  %v501 = vadd.f32 %v481, %v497
  %v502 = vadd.f32 %v482, %v498
  %v503 = vadd.f32 %v483, %v499
  %v504 = vadd.f32 %v500, %v400
  %v505 = vadd.f32 %v501, %v401
  %v506 = vadd.f32 %v502, %v402
  %v507 = vadd.f32 %v503, %v403
  %v508 = vmax.f32 %v504, 0.0
  %v509 = vmax.f32 %v505, 0.0
  %v510 = vmax.f32 %v506, 0.0
  %v511 = vmax.f32 %v507, 0.0
  %v512 = vpack.c.bf16 %v510, %v508
  %v513 = vpack.c.bf16 %v511, %v509
  %v514 = vld [vmem:[%s1 + $0x50] sm:$0xf]
  %v515 = vld [vmem:[%s1 + $0x54] sm:$0xf]
  %v516 = vld [vmem:[%s1 + $0x58] sm:$0xf]
  %v517 = vld [vmem:[%s1 + $0x5c] sm:$0xf]
  %v518 = vld [vmem:[%s1 + $0x60] sm:$0xf]
  %v519 = vld [vmem:[%s1 + $0x64] sm:$0xf]
  %v520 = vld [vmem:[%s1 + $0x68] sm:$0xf]
  %v521 = vld [vmem:[%s1 + $0x6c] sm:$0xf]
  %v522 = vld [vmem:[%s1 + $0x70] sm:$0xf]
  %v523 = vld [vmem:[%s1 + $0x74] sm:$0xf]
  %v534 = vunpack.c.l.b16 %v514
  %v535 = vunpack.c.l.b16 %v515
  %v536 = vunpack.c.l.b16 %v516
  %v537 = vunpack.c.l.b16 %v517
  %v538 = vunpack.c.l.b16 %v518
  %v539 = vunpack.c.l.b16 %v519
  %v540 = vunpack.c.l.b16 %v520
  %v541 = vunpack.c.l.b16 %v521
  %v542 = vunpack.c.l.b16 %v522
  %v543 = vunpack.c.l.b16 %v523
  %v544 = vpack.c.b16 %v535, %v534
  %v545 = vpack.c.b16 %v537, %v536
  %v546 = vpack.c.b16 %v539, %v538
  %v547 = vpack.c.b16 %v541, %v540
  %v548 = vpack.c.b16 %v543, %v542
  %v550 = vsel %vm45, %v544, 0
  %v553 = vsel %vm45, %v545, 0
  %v556 = vsel %vm45, %v546, 0
  %v559 = vsel %vm45, %v547, 0
  %v562 = vsel %vm45, %v548, 0
  %564 = vmatpush.bf16.msra.mxu0 0
  %565 = vmatpush.bf16.msra.mxu0 0
  %566 = vmatpush.bf16.msra.mxu0 0
  %567 = vmatpush.bf16.msra.mxu0 0
  %568 = vmatpush.bf16.msra.mxu0 0
  %569 = vmatpush.bf16.msra.mxu0 0
  %570 = vmatpush.bf16.msra.mxu0 0
  %571 = vmatpush.bf16.msra.mxu0 %v512
  %572 = vmatmul.bf16.gmra.mxu0 %v550
  %v573 = vpop.f32.mrf.mxu0
  %v574 = vadd.f32 0.0, %v573
  %v575 = vpop.f32.mrf.mxu0
  %v576 = vadd.f32 0.0, %v575
  %577 = vmatmul.bf16.gmra.mxu0 %v553
  %v578 = vpop.f32.mrf.mxu0
  %v579 = vadd.f32 0.0, %v578
  %v580 = vpop.f32.mrf.mxu0
  %v581 = vadd.f32 0.0, %v580
  %582 = vmatmul.bf16.gmra.mxu0 %v556
  %v583 = vpop.f32.mrf.mxu0
  %v584 = vadd.f32 0.0, %v583
  %v585 = vpop.f32.mrf.mxu0
  %v586 = vadd.f32 0.0, %v585
  %587 = vmatmul.bf16.gmra.mxu0 %v559
  %v588 = vpop.f32.mrf.mxu0
  %v589 = vadd.f32 0.0, %v588
  %v590 = vpop.f32.mrf.mxu0
  %v591 = vadd.f32 0.0, %v590
  %592 = vmatmul.bf16.gmra.mxu0 %v562
  %v593 = vpop.f32.mrf.mxu0
  %v594 = vadd.f32 0.0, %v593
  %v595 = vpop.f32.mrf.mxu0
  %v596 = vadd.f32 0.0, %v595
  %597 = vdwg.mxu0
  %598 = vmatpush.bf16.msra.mxu0 0
  %599 = vmatpush.bf16.msra.mxu0 0
  %600 = vmatpush.bf16.msra.mxu0 0
  %601 = vmatpush.bf16.msra.mxu0 0
  %602 = vmatpush.bf16.msra.mxu0 0
  %603 = vmatpush.bf16.msra.mxu0 0
  %604 = vmatpush.bf16.msra.mxu0 0
  %605 = vmatpush.bf16.msra.mxu0 %v513
  %606 = vmatmul.bf16.gmra.mxu0 %v550
  %v607 = vpop.f32.mrf.mxu0
  %v608 = vadd.f32 0.0, %v607
  %v609 = vpop.f32.mrf.mxu0
  %v610 = vadd.f32 0.0, %v609
  %611 = vmatmul.bf16.gmra.mxu0 %v553
  %v612 = vpop.f32.mrf.mxu0
  %v613 = vadd.f32 0.0, %v612
  %v614 = vpop.f32.mrf.mxu0
  %v615 = vadd.f32 0.0, %v614
  %616 = vmatmul.bf16.gmra.mxu0 %v556
  %v617 = vpop.f32.mrf.mxu0
  %v618 = vadd.f32 0.0, %v617
  %v619 = vpop.f32.mrf.mxu0
  %v620 = vadd.f32 0.0, %v619
  %621 = vmatmul.bf16.gmra.mxu0 %v559
  %v622 = vpop.f32.mrf.mxu0
  %v623 = vadd.f32 0.0, %v622
  %v624 = vpop.f32.mrf.mxu0
  %v625 = vadd.f32 0.0, %v624
  %626 = vmatmul.bf16.gmra.mxu0 %v562
  %v627 = vpop.f32.mrf.mxu0
  %v628 = vadd.f32 0.0, %v627
  %v629 = vpop.f32.mrf.mxu0
  %v630 = vadd.f32 0.0, %v629
  %631 = vdwg.mxu0
  %632 = vrot.lane.b32.xlu0 %v574, 16
  %v633 = vpop.permute.xlu0 %632
  %634 = vrot.lane.b32.xlu0 %v576, 16
  %v635 = vpop.permute.xlu0 %634
  %636 = vrot.lane.b32.xlu0 %v608, 16
  %v637 = vpop.permute.xlu0 %636
  %638 = vrot.lane.b32.xlu0 %v610, 16
  %v639 = vpop.permute.xlu0 %638
  %v640 = vsel %vm312, %v633, %v637
  %v641 = vsel %vm312, %v635, %v639
  %v642 = vsel %vm312, %v637, %v633
  %v643 = vsel %vm312, %v639, %v635
  %v644 = vmul.f32 %v642, %v317
  %v645 = vmul.f32 %v640, %v318
  %v646 = vmul.f32 %v643, %v317
  %v647 = vmul.f32 %v641, %v318
  %v648 = vadd.f32 %v584, %v644
  %v649 = vadd.f32 %v618, %v645
  %v650 = vadd.f32 %v586, %v646
  %v651 = vadd.f32 %v620, %v647
  %652 = vrot.lane.b32.xlu0 %v579, 8
  %v653 = vpop.permute.xlu0 %652
  %654 = vrot.lane.b32.xlu0 %v581, 8
  %v655 = vpop.permute.xlu0 %654
  %656 = vrot.lane.b32.xlu0 %v613, 8
  %v657 = vpop.permute.xlu0 %656
  %658 = vrot.lane.b32.xlu0 %v615, 8
  %v659 = vpop.permute.xlu0 %658
  %v660 = vsel %vm335, %v653, %v657
  %v661 = vsel %vm335, %v655, %v659
  %v662 = vsel %vm335, %v657, %v653
  %v663 = vsel %vm335, %v659, %v655
  %v664 = vmul.f32 %v662, %v340
  %v665 = vmul.f32 %v660, %v341
  %v666 = vmul.f32 %v663, %v340
  %v667 = vmul.f32 %v661, %v341
  %v668 = vadd.f32 %v648, %v664
  %v669 = vadd.f32 %v649, %v665
  %v670 = vadd.f32 %v650, %v666
  %v671 = vadd.f32 %v651, %v667
  %672 = vrot.lane.b32.xlu0 %v589, 120
  %v673 = vpop.permute.xlu0 %672
  %674 = vrot.lane.b32.xlu0 %v591, 120
  %v675 = vpop.permute.xlu0 %674
  %676 = vrot.lane.b32.xlu0 %v623, 120
  %v677 = vpop.permute.xlu0 %676
  %678 = vrot.lane.b32.xlu0 %v625, 120
  %v679 = vpop.permute.xlu0 %678
  %v680 = vsel %vm358, %v673, %v677
  %v681 = vsel %vm358, %v675, %v679
  %v682 = vsel %vm358, %v677, %v673
  %v683 = vsel %vm358, %v679, %v675
  %v684 = vmul.f32 %v680, %v363
  %v685 = vmul.f32 %v682, %v364
  %v686 = vmul.f32 %v681, %v363
  %v687 = vmul.f32 %v683, %v364
  %v688 = vadd.f32 %v668, %v684
  %v689 = vadd.f32 %v669, %v685
  %v690 = vadd.f32 %v670, %v686
  %v691 = vadd.f32 %v671, %v687
  %692 = vrot.lane.b32.xlu0 %v594, 112
  %v693 = vpop.permute.xlu0 %692
  %694 = vrot.lane.b32.xlu0 %v596, 112
  %v695 = vpop.permute.xlu0 %694
  %696 = vrot.lane.b32.xlu0 %v628, 112
  %v697 = vpop.permute.xlu0 %696
  %698 = vrot.lane.b32.xlu0 %v630, 112
  %v699 = vpop.permute.xlu0 %698
  %v700 = vsel %vm381, %v693, %v697
  %v701 = vsel %vm381, %v695, %v699
  %v702 = vsel %vm381, %v697, %v693
  %v703 = vsel %vm381, %v699, %v695
  %v704 = vmul.f32 %v700, %v386
  %v705 = vmul.f32 %v702, %v387
  %v706 = vmul.f32 %v701, %v386
  %v707 = vmul.f32 %v703, %v387
  %v708 = vadd.f32 %v688, %v704
  %v709 = vadd.f32 %v689, %v705
  %v710 = vadd.f32 %v690, %v706
  %v711 = vadd.f32 %v691, %v707
  %v712 = vadd.f32 %v708, %v508
  %v713 = vadd.f32 %v709, %v509
  %v714 = vadd.f32 %v710, %v510
  %v715 = vadd.f32 %v711, %v511
  %v716 = vmax.f32 %v712, 0.0
  %v717 = vmax.f32 %v713, 0.0
  %v718 = vmax.f32 %v714, 0.0
  %v719 = vmax.f32 %v715, 0.0
  %v720 = vmul.f32 %v716, 1.999995
  %v721 = vmul.f32 %v717, 1.999995
  %v722 = vmul.f32 %v718, 1.999995
  %v723 = vmul.f32 %v719, 1.999995
  %v724 = vpack.c.bf16 %v722, %v720
  %v725 = vpack.c.bf16 %v723, %v721
  %v726 = vld [vmem:[%s1 + $0x78] sm:$0xf]
  %v727 = vld [vmem:[%s1 + $0x7c] sm:$0xf]
  %v728 = vld [vmem:[%s1 + $0x80] sm:$0xf]
  %v729 = vld [vmem:[%s1 + $0x84] sm:$0xf]
  %v734 = vunpack.c.l.b16 %v726
  %v735 = vunpack.c.l.b16 %v727
  %v736 = vunpack.c.l.b16 %v728
  %v737 = vunpack.c.l.b16 %v729
  %v738 = vpack.c.b16 %v735, %v734
  %v739 = vpack.c.b16 %v737, %v736
  %v741 = vsel %vm45, %v738, 0
  %v744 = vsel %vm45, %v739, 0
  %746 = vmatpush.bf16.msra.mxu0 0
  %747 = vmatpush.bf16.msra.mxu0 0
  %748 = vmatpush.bf16.msra.mxu0 0
  %749 = vmatpush.bf16.msra.mxu0 0
  %750 = vmatpush.bf16.msra.mxu0 0
  %751 = vmatpush.bf16.msra.mxu0 0
  %752 = vmatpush.bf16.msra.mxu0 0
  %753 = vmatpush.bf16.msra.mxu0 %v724
  %754 = vmatmul.bf16.gmra.mxu0 %v741
  %v755 = vpop.f32.mrf.mxu0
  %v756 = vadd.f32 0.0, %v755
  %v757 = vpop.f32.mrf.mxu0
  %v758 = vadd.f32 0.0, %v757
  %759 = vmatmul.bf16.gmra.mxu0 %v744
  %v760 = vpop.f32.mrf.mxu0
  %v761 = vadd.f32 0.0, %v760
  %v762 = vpop.f32.mrf.mxu0
  %v763 = vadd.f32 0.0, %v762
  %764 = vdwg.mxu0
  %765 = vmatpush.bf16.msra.mxu0 0
  %766 = vmatpush.bf16.msra.mxu0 0
  %767 = vmatpush.bf16.msra.mxu0 0
  %768 = vmatpush.bf16.msra.mxu0 0
  %769 = vmatpush.bf16.msra.mxu0 0
  %770 = vmatpush.bf16.msra.mxu0 0
  %771 = vmatpush.bf16.msra.mxu0 0
  %772 = vmatpush.bf16.msra.mxu0 %v725
  %773 = vmatmul.bf16.gmra.mxu0 %v741
  %v774 = vpop.f32.mrf.mxu0
  %v775 = vadd.f32 0.0, %v774
  %v776 = vpop.f32.mrf.mxu0
  %v777 = vadd.f32 0.0, %v776
  %778 = vmatmul.bf16.gmra.mxu0 %v744
  %v779 = vpop.f32.mrf.mxu0
  %v780 = vadd.f32 0.0, %v779
  %v781 = vpop.f32.mrf.mxu0
  %v782 = vadd.f32 0.0, %v781
  %783 = vdwg.mxu0
  %784 = vrot.lane.b32.xlu0 %v761, 1
  %v785 = vpop.permute.xlu0 %784
  %786 = vrot.lane.b32.xlu0 %v763, 1
  %v787 = vpop.permute.xlu0 %786
  %788 = vrot.lane.b32.xlu0 %v780, 1
  %v789 = vpop.permute.xlu0 %788
  %790 = vrot.lane.b32.xlu0 %v782, 1
  %v791 = vpop.permute.xlu0 %790
  %v792 = vsel %vm100, %v785, %v789
  %v793 = vsel %vm100, %v787, %v791
  %v794 = vsel %vm100, %v789, %v785
  %v795 = vsel %vm100, %v791, %v787
  %v796 = vmul.f32 %v794, %v105
  %v797 = vmul.f32 %v792, %v106
  %v798 = vmul.f32 %v795, %v105
  %v799 = vmul.f32 %v793, %v106
  %v800 = vadd.f32 %v756, %v796
  %v801 = vadd.f32 %v775, %v797
  %v802 = vadd.f32 %v758, %v798
  %v803 = vadd.f32 %v777, %v799
  %804 = vrot.lane.b32.xlu0 %v761, 127
  %v805 = vpop.permute.xlu0 %804
  %806 = vrot.lane.b32.xlu0 %v763, 127
  %v807 = vpop.permute.xlu0 %806
  %808 = vrot.lane.b32.xlu0 %v780, 127
  %v809 = vpop.permute.xlu0 %808
  %810 = vrot.lane.b32.xlu0 %v782, 127
  %v811 = vpop.permute.xlu0 %810
  %v812 = vsel %vm123, %v805, %v809
  %v813 = vsel %vm123, %v807, %v811
  %v814 = vsel %vm123, %v809, %v805
  %v815 = vsel %vm123, %v811, %v807
  %v816 = vmul.f32 %v812, %v128
  %v817 = vmul.f32 %v814, %v129
  %v818 = vmul.f32 %v813, %v128
  %v819 = vmul.f32 %v815, %v129
  %v820 = vadd.f32 %v800, %v816
  %v821 = vadd.f32 %v801, %v817
  %v822 = vadd.f32 %v802, %v818
  %v823 = vadd.f32 %v803, %v819
  %v824 = vadd.f32 %v820, %v720
  %v825 = vadd.f32 %v821, %v721
  %v826 = vadd.f32 %v822, %v722
  %v827 = vadd.f32 %v823, %v723
  %v828 = vmax.f32 %v824, 0.0
  %v829 = vmax.f32 %v825, 0.0
  %v830 = vmax.f32 %v826, 0.0
  %v831 = vmax.f32 %v827, 0.0
  %v832 = vpack.c.bf16 %v830, %v828
  %v833 = vpack.c.bf16 %v831, %v829
  %v834 = vld [vmem:[%s1 + $0x88] sm:$0xf]
  %v835 = vld [vmem:[%s1 + $0x8c] sm:$0xf]
  %v836 = vld [vmem:[%s1 + $0x90] sm:$0xf]
  %v837 = vld [vmem:[%s1 + $0x94] sm:$0xf]
  %v838 = vld [vmem:[%s1 + $0x98] sm:$0xf]
  %v839 = vld [vmem:[%s1 + $0x9c] sm:$0xf]
  %v840 = vld [vmem:[%s1 + $0xa0] sm:$0xf]
  %v841 = vld [vmem:[%s1 + $0xa4] sm:$0xf]
  %v842 = vld [vmem:[%s1 + $0xa8] sm:$0xf]
  %v843 = vld [vmem:[%s1 + $0xac] sm:$0xf]
  %v854 = vunpack.c.l.b16 %v834
  %v855 = vunpack.c.l.b16 %v835
  %v856 = vunpack.c.l.b16 %v836
  %v857 = vunpack.c.l.b16 %v837
  %v858 = vunpack.c.l.b16 %v838
  %v859 = vunpack.c.l.b16 %v839
  %v860 = vunpack.c.l.b16 %v840
  %v861 = vunpack.c.l.b16 %v841
  %v862 = vunpack.c.l.b16 %v842
  %v863 = vunpack.c.l.b16 %v843
  %v864 = vpack.c.b16 %v855, %v854
  %v865 = vpack.c.b16 %v857, %v856
  %v866 = vpack.c.b16 %v859, %v858
  %v867 = vpack.c.b16 %v861, %v860
  %v868 = vpack.c.b16 %v863, %v862
  %v870 = vsel %vm45, %v864, 0
  %v873 = vsel %vm45, %v865, 0
  %v876 = vsel %vm45, %v866, 0
  %v879 = vsel %vm45, %v867, 0
  %v882 = vsel %vm45, %v868, 0
  %884 = vmatpush.bf16.msra.mxu0 0
  %885 = vmatpush.bf16.msra.mxu0 0
  %886 = vmatpush.bf16.msra.mxu0 0
  %887 = vmatpush.bf16.msra.mxu0 0
  %888 = vmatpush.bf16.msra.mxu0 0
  %889 = vmatpush.bf16.msra.mxu0 0
  %890 = vmatpush.bf16.msra.mxu0 0
  %891 = vmatpush.bf16.msra.mxu0 %v832
  %892 = vmatmul.bf16.gmra.mxu0 %v870
  %v893 = vpop.f32.mrf.mxu0
  %v894 = vadd.f32 0.0, %v893
  %v895 = vpop.f32.mrf.mxu0
  %v896 = vadd.f32 0.0, %v895
  %897 = vmatmul.bf16.gmra.mxu0 %v873
  %v898 = vpop.f32.mrf.mxu0
  %v899 = vadd.f32 0.0, %v898
  %v900 = vpop.f32.mrf.mxu0
  %v901 = vadd.f32 0.0, %v900
  %902 = vmatmul.bf16.gmra.mxu0 %v876
  %v903 = vpop.f32.mrf.mxu0
  %v904 = vadd.f32 0.0, %v903
  %v905 = vpop.f32.mrf.mxu0
  %v906 = vadd.f32 0.0, %v905
  %907 = vmatmul.bf16.gmra.mxu0 %v879
  %v908 = vpop.f32.mrf.mxu0
  %v909 = vadd.f32 0.0, %v908
  %v910 = vpop.f32.mrf.mxu0
  %v911 = vadd.f32 0.0, %v910
  %912 = vmatmul.bf16.gmra.mxu0 %v882
  %v913 = vpop.f32.mrf.mxu0
  %v914 = vadd.f32 0.0, %v913
  %v915 = vpop.f32.mrf.mxu0
  %v916 = vadd.f32 0.0, %v915
  %917 = vdwg.mxu0
  %918 = vmatpush.bf16.msra.mxu0 0
  %919 = vmatpush.bf16.msra.mxu0 0
  %920 = vmatpush.bf16.msra.mxu0 0
  %921 = vmatpush.bf16.msra.mxu0 0
  %922 = vmatpush.bf16.msra.mxu0 0
  %923 = vmatpush.bf16.msra.mxu0 0
  %924 = vmatpush.bf16.msra.mxu0 0
  %925 = vmatpush.bf16.msra.mxu0 %v833
  %926 = vmatmul.bf16.gmra.mxu0 %v870
  %v927 = vpop.f32.mrf.mxu0
  %v928 = vadd.f32 0.0, %v927
  %v929 = vpop.f32.mrf.mxu0
  %v930 = vadd.f32 0.0, %v929
  %931 = vmatmul.bf16.gmra.mxu0 %v873
  %v932 = vpop.f32.mrf.mxu0
  %v933 = vadd.f32 0.0, %v932
  %v934 = vpop.f32.mrf.mxu0
  %v935 = vadd.f32 0.0, %v934
  %936 = vmatmul.bf16.gmra.mxu0 %v876
  %v937 = vpop.f32.mrf.mxu0
  %v938 = vadd.f32 0.0, %v937
  %v939 = vpop.f32.mrf.mxu0
  %v940 = vadd.f32 0.0, %v939
  %941 = vmatmul.bf16.gmra.mxu0 %v879
  %v942 = vpop.f32.mrf.mxu0
  %v943 = vadd.f32 0.0, %v942
  %v944 = vpop.f32.mrf.mxu0
  %v945 = vadd.f32 0.0, %v944
  %946 = vmatmul.bf16.gmra.mxu0 %v882
  %v947 = vpop.f32.mrf.mxu0
  %v948 = vadd.f32 0.0, %v947
  %v949 = vpop.f32.mrf.mxu0
  %v950 = vadd.f32 0.0, %v949
  %951 = vdwg.mxu0
  %952 = vrot.lane.b32.xlu0 %v894, 16
  %v953 = vpop.permute.xlu0 %952
  %954 = vrot.lane.b32.xlu0 %v896, 16
  %v955 = vpop.permute.xlu0 %954
  %956 = vrot.lane.b32.xlu0 %v928, 16
  %v957 = vpop.permute.xlu0 %956
  %958 = vrot.lane.b32.xlu0 %v930, 16
  %v959 = vpop.permute.xlu0 %958
  %v960 = vsel %vm312, %v953, %v957
  %v961 = vsel %vm312, %v955, %v959
  %v962 = vsel %vm312, %v957, %v953
  %v963 = vsel %vm312, %v959, %v955
  %v964 = vmul.f32 %v962, %v317
  %v965 = vmul.f32 %v960, %v318
  %v966 = vmul.f32 %v963, %v317
  %v967 = vmul.f32 %v961, %v318
  %v968 = vadd.f32 %v904, %v964
  %v969 = vadd.f32 %v938, %v965
  %v970 = vadd.f32 %v906, %v966
  %v971 = vadd.f32 %v940, %v967
  %972 = vrot.lane.b32.xlu0 %v899, 8
  %v973 = vpop.permute.xlu0 %972
  %974 = vrot.lane.b32.xlu0 %v901, 8
  %v975 = vpop.permute.xlu0 %974
  %976 = vrot.lane.b32.xlu0 %v933, 8
  %v977 = vpop.permute.xlu0 %976
  %978 = vrot.lane.b32.xlu0 %v935, 8
  %v979 = vpop.permute.xlu0 %978
  %v980 = vsel %vm335, %v973, %v977
  %v981 = vsel %vm335, %v975, %v979
  %v982 = vsel %vm335, %v977, %v973
  %v983 = vsel %vm335, %v979, %v975
  %v984 = vmul.f32 %v982, %v340
  %v985 = vmul.f32 %v980, %v341
  %v986 = vmul.f32 %v983, %v340
  %v987 = vmul.f32 %v981, %v341
  %v988 = vadd.f32 %v968, %v984
  %v989 = vadd.f32 %v969, %v985
  %v990 = vadd.f32 %v970, %v986
  %v991 = vadd.f32 %v971, %v987
  %992 = vrot.lane.b32.xlu0 %v909, 120
  %v993 = vpop.permute.xlu0 %992
  %994 = vrot.lane.b32.xlu0 %v911, 120
  %v995 = vpop.permute.xlu0 %994
  %996 = vrot.lane.b32.xlu0 %v943, 120
  %v997 = vpop.permute.xlu0 %996
  %998 = vrot.lane.b32.xlu0 %v945, 120
  %v999 = vpop.permute.xlu0 %998
  %v1000 = vsel %vm358, %v993, %v997
  %v1001 = vsel %vm358, %v995, %v999
  %v1002 = vsel %vm358, %v997, %v993
  %v1003 = vsel %vm358, %v999, %v995
  %v1004 = vmul.f32 %v1000, %v363
  %v1005 = vmul.f32 %v1002, %v364
  %v1006 = vmul.f32 %v1001, %v363
  %v1007 = vmul.f32 %v1003, %v364
  %v1008 = vadd.f32 %v988, %v1004
  %v1009 = vadd.f32 %v989, %v1005
  %v1010 = vadd.f32 %v990, %v1006
  %v1011 = vadd.f32 %v991, %v1007
  %1012 = vrot.lane.b32.xlu0 %v914, 112
  %v1013 = vpop.permute.xlu0 %1012
  %1014 = vrot.lane.b32.xlu0 %v916, 112
  %v1015 = vpop.permute.xlu0 %1014
  %1016 = vrot.lane.b32.xlu0 %v948, 112
  %v1017 = vpop.permute.xlu0 %1016
  %1018 = vrot.lane.b32.xlu0 %v950, 112
  %v1019 = vpop.permute.xlu0 %1018
  %v1020 = vsel %vm381, %v1013, %v1017
  %v1021 = vsel %vm381, %v1015, %v1019
  %v1022 = vsel %vm381, %v1017, %v1013
  %v1023 = vsel %vm381, %v1019, %v1015
  %v1024 = vmul.f32 %v1020, %v386
  %v1025 = vmul.f32 %v1022, %v387
  %v1026 = vmul.f32 %v1021, %v386
  %v1027 = vmul.f32 %v1023, %v387
  %v1028 = vadd.f32 %v1008, %v1024
  %v1029 = vadd.f32 %v1009, %v1025
  %v1030 = vadd.f32 %v1010, %v1026
  %v1031 = vadd.f32 %v1011, %v1027
  %v1032 = vadd.f32 %v1028, %v828
  %v1033 = vadd.f32 %v1029, %v829
  %v1034 = vadd.f32 %v1030, %v830
  %v1035 = vadd.f32 %v1031, %v831
  %v1036 = vmax.f32 %v1032, 0.0
  %v1037 = vmax.f32 %v1033, 0.0
  %v1038 = vmax.f32 %v1034, 0.0
  %v1039 = vmax.f32 %v1035, 0.0
  %v1040 = vmul.f32 %v1036, 1.999995
  %v1041 = vmul.f32 %v1037, 1.999995
  %v1042 = vmul.f32 %v1038, 1.999995
  %v1043 = vmul.f32 %v1039, 1.999995
  %1044 = vst [vmem:[%s5] sm:$0xff] %v1040
  %1045 = vst [vmem:[%s5 + $0x8] sm:$0xff] %v1041
  %1046 = vst [vmem:[%s5 + $0x10] sm:$0xff] %v1042
  %1047 = vst [vmem:[%s5 + $0x18] sm:$0xff] %v1043
  %v1048 = vld [vmem:[%s3] sm:$0xff]
  %v1049 = vld [vmem:[%s3 + $0x8] sm:$0xff]
  %v1050 = vld [vmem:[%s3 + $0x10] sm:$0xff]
  %v1051 = vld [vmem:[%s3 + $0x18] sm:$0xff]
  %v1052 = vld [vmem:[%s3 + $0x20] sm:$0xff]
  %v1053 = vld [vmem:[%s3 + $0x28] sm:$0xff]
  %v1054 = vld [vmem:[%s3 + $0x30] sm:$0xff]
  %v1055 = vld [vmem:[%s3 + $0x38] sm:$0xff]
  %v1056 = vld [vmem:[%s3 + $0x40] sm:$0xff]
  %v1057 = vld [vmem:[%s3 + $0x48] sm:$0xff]
  %v1058 = vld [vmem:[%s3 + $0x50] sm:$0xff]
  %v1059 = vld [vmem:[%s3 + $0x58] sm:$0xff]
  %v1060 = vld [vmem:[%s3 + $0x60] sm:$0xff]
  %v1061 = vld [vmem:[%s3 + $0x68] sm:$0xff]
  %v1062 = vld [vmem:[%s3 + $0x70] sm:$0xff]
  %v1063 = vld [vmem:[%s3 + $0x78] sm:$0xff]
  %v1064 = vld [vmem:[%s3 + $0x80] sm:$0xff]
  %v1065 = vld [vmem:[%s3 + $0x88] sm:$0xff]
  %v1066 = vld [vmem:[%s3 + $0x90] sm:$0xff]
  %v1067 = vld [vmem:[%s3 + $0x98] sm:$0xff]
  %v1068 = vld [vmem:[%s3 + $0xa0] sm:$0xff]
  %v1069 = vld [vmem:[%s3 + $0xa8] sm:$0xff]
  %v1070 = vld [vmem:[%s3 + $0xb0] sm:$0xff]
  %v1071 = vld [vmem:[%s3 + $0xb8] sm:$0xff]
  %v1072 = vld [vmem:[%s3 + $0xc0] sm:$0xff]
  %v1073 = vld [vmem:[%s3 + $0xc8] sm:$0xff]
  %v1074 = vld [vmem:[%s3 + $0xd0] sm:$0xff]
  %v1075 = vld [vmem:[%s3 + $0xd8] sm:$0xff]
  %v1076 = vld [vmem:[%s3 + $0xe0] sm:$0xff]
  %v1077 = vld [vmem:[%s3 + $0xe8] sm:$0xff]
  %v1078 = vld [vmem:[%s3 + $0xf0] sm:$0xff]
  %v1079 = vld [vmem:[%s3 + $0xf8] sm:$0xff]
  %1080 = vmatpush.msra.mxu0 %v1063
  %1081 = vmatpush.msra.mxu0 %v1062
  %1082 = vmatpush.msra.mxu0 %v1061
  %1083 = vmatpush.msra.mxu0 %v1060
  %1084 = vmatpush.msra.mxu0 %v1059
  %1085 = vmatpush.msra.mxu0 %v1058
  %1086 = vmatpush.msra.mxu0 %v1057
  %1087 = vmatpush.msra.mxu0 %v1056
  %1088 = vmatpush.msra.mxu0 %v1055
  %1089 = vmatpush.msra.mxu0 %v1054
  %1090 = vmatpush.msra.mxu0 %v1053
  %1091 = vmatpush.msra.mxu0 %v1052
  %1092 = vmatpush.msra.mxu0 %v1051
  %1093 = vmatpush.msra.mxu0 %v1050
  %1094 = vmatpush.msra.mxu0 %v1049
  %1095 = vmatpush.msra.mxu0 %v1048
  %1096 = vmatmul.f32.gmra.mxu0 %v1040
  %v1097 = vpop.f32.mrf.mxu0
  %v1098 = vadd.f32 0.0, %v1097
  %1099 = vmatmul.f32.gmra.mxu0 %v1042
  %v1100 = vpop.f32.mrf.mxu0
  %v1101 = vadd.f32 0.0, %v1100
  %1102 = vdwg.mxu0
  %1103 = vmatpush.msra.mxu0 %v1079
  %1104 = vmatpush.msra.mxu0 %v1078
  %1105 = vmatpush.msra.mxu0 %v1077
  %1106 = vmatpush.msra.mxu0 %v1076
  %1107 = vmatpush.msra.mxu0 %v1075
  %1108 = vmatpush.msra.mxu0 %v1074
  %1109 = vmatpush.msra.mxu0 %v1073
  %1110 = vmatpush.msra.mxu0 %v1072
  %1111 = vmatpush.msra.mxu0 %v1071
  %1112 = vmatpush.msra.mxu0 %v1070
  %1113 = vmatpush.msra.mxu0 %v1069
  %1114 = vmatpush.msra.mxu0 %v1068
  %1115 = vmatpush.msra.mxu0 %v1067
  %1116 = vmatpush.msra.mxu0 %v1066
  %1117 = vmatpush.msra.mxu0 %v1065
  %1118 = vmatpush.msra.mxu0 %v1064
  %1119 = vmatmul.f32.gmra.mxu0 %v1041
  %v1120 = vpop.f32.mrf.mxu0
  %v1121 = vadd.f32 %v1098, %v1120
  %1122 = vmatmul.f32.gmra.mxu0 %v1043
  %v1123 = vpop.f32.mrf.mxu0
  %v1124 = vadd.f32 %v1101, %v1123
  %1125 = vdwg.mxu0
  %v1126 = vld [vmem:[%s4] sm:$0xff]
  %v1127 = vld [vmem:[%s4 + $0x8] sm:$0x3]
  %v1129 = vsel %vm45, %v1126, 0
  %v1132 = vsel %vm45, %v1127, 0
  %1134 = vmatpush.msra.mxu0 0.0
  %1135 = vmatpush.msra.mxu0 0.0
  %1136 = vmatpush.msra.mxu0 0.0
  %1137 = vmatpush.msra.mxu0 0.0
  %1138 = vmatpush.msra.mxu0 0.0
  %1139 = vmatpush.msra.mxu0 0.0
  %1140 = vmatpush.msra.mxu0 0.0
  %1141 = vmatpush.msra.mxu0 0.0
  %1142 = vmatpush.msra.mxu0 0.0
  %1143 = vmatpush.msra.mxu0 0.0
  %1144 = vmatpush.msra.mxu0 0.0
  %1145 = vmatpush.msra.mxu0 0.0
  %1146 = vmatpush.msra.mxu0 0.0
  %1147 = vmatpush.msra.mxu0 0.0
  %1148 = vmatpush.msra.mxu0 %v1124
  %1149 = vmatpush.msra.mxu0 %v1121
  %1150 = vmatmul.f32.gmra.mxu0 %v1129
  %v1151 = vpop.f32.mrf.mxu0
  %v1152 = vadd.f32 0.0, %v1151
  %1153 = vmatmul.f32.gmra.mxu0 %v1132
  %v1154 = vpop.f32.mrf.mxu0
  %v1155 = vadd.f32 0.0, %v1154
  %1156 = vdwg.mxu0
  %vm1157 = vcmask 15360
  %1158 = vst.msk [vmem:[%s6] sm:$0xff] %vm1157, %v1152
  %vm1159 = vcmask 9216
  %1160 = vst.msk [vmem:[%s6 + $0x8] sm:$0x3] %vm1159, %v1155
  // Predicated region
  $region22: #{forward.1} parent=0 // pred_check
    _
  $region23: #{forward.1} parent=0 // pred_check_branch
    %1162 = sbr.rel (0) target = $region25
  $region24: #{forward.1} parent=0 // pred_region
    _
  $region25: #{forward.1} parent=0 // pred_fallthru
    _
  // Predicated region
  $region26: #{forward.1} parent=0 // pred_check
    _
  $region27: #{forward.1} parent=0 // pred_check_branch
    %1164 = sbr.rel (0) target = $region29
  $region28: #{forward.1} parent=0 // pred_region
    _
  $region29: #{forward.1} parent=0 // pred_fallthru
    _
  // Predicated region
  $region30: #{forward.1} parent=0 // pred_check
    _
  $region31: #{forward.1} parent=0 // pred_check_branch
    %1166 = sbr.rel (0) target = $region33
  $region32: #{forward.1} parent=0 // pred_region
    _
  $region33: #{forward.1} parent=0 // pred_fallthru
    _
  // Predicated region
  $region34: #{forward.1} parent=0 // pred_check
    _
  $region35: #{forward.1} parent=0 // pred_check_branch
    %1168 = sbr.rel (0) target = $region37
  $region36: #{forward.1} parent=0 // pred_region
    _
  $region37: #{forward.1} parent=0 // pred_fallthru
    _

</llo_original>
